<compile_context>
chip_gen: v6e
topology: v6e:2x2x1
jax: 0.10.0
libtpu: 0.0.40
codegen_flags: <defaults>
</compile_context>

<pallas_src>
import functools
import math

import jax
import jax.numpy as jnp
import numpy as np
from jax import lax
from jax.experimental import pallas as pl
from jax.experimental.pallas import tpu as pltpu


def _pick_tile(n, cap):
    """Largest divisor of n that is <= cap and a multiple of 8, else n."""
    if n <= cap:
        return n
    for c in range(cap - cap % 8, 0, -8):
        if n % c == 0:
            return c
    return n


def _self_attention_kernel(x_ref, w_in_ref, b_in_ref, w_out_ref, b_out_ref,
                           out_ref, proj_ref, *, n_head, head_dim, kv_heads,
                           scale, tq, tk):
    # x_ref     : (1, T, C)          full sequence of this batch element
    # w_in_ref  : (C, in_dim) bf16   pre-transposed fused [q|k|v] projection
    # b_in_ref  : (1, in_dim) f32
    # w_out_ref : (C, C)      bf16   pre-transposed output projection
    # b_out_ref : (1, C)      f32
    # out_ref   : (1, tq, C)         output for this query tile
    # proj_ref  : (T, in_dim) bf16   scratch: fused projection (per batch elem)
    T = x_ref.shape[1]
    C = x_ref.shape[2]
    kv_width = kv_heads * head_dim
    n_kv = T // tk
    qi = pl.program_id(1)

    # ---- fused input projection, computed once per batch element ----------
    @pl.when(qi == 0)
    def _():
        xb = x_ref[0].astype(jnp.bfloat16)                       # (T, C)
        pj = jnp.dot(xb, w_in_ref[...],
                     preferred_element_type=jnp.float32)         # (T, in_dim)
        proj_ref[...] = (pj + b_in_ref[...]).astype(jnp.bfloat16)

    row0 = pl.multiple_of(qi * tq, tq)

    acc = jnp.zeros((tq, C), jnp.float32)                        # out-proj acc

    # MQA: the single shared KV head is identical for every query head; hoist
    # the extraction out of the head loop.
    if kv_heads == 1:
        k_shared = proj_ref[:, C:C + head_dim]                   # (T, D) bf16
        v_shared = proj_ref[:, C + kv_width:C + kv_width + head_dim]

    for h in range(n_head):
        q_lo = h * head_dim
        qh = proj_ref[pl.ds(row0, tq), q_lo:q_lo + head_dim]     # (tq, D) bf16

        if kv_heads == 1:
            kh_full, vh_full = k_shared, v_shared
        else:
            k_lo = C + h * head_dim
            v_lo = C + kv_width + h * head_dim
            kh_full = proj_ref[:, k_lo:k_lo + head_dim]          # (T, D) bf16
            vh_full = proj_ref[:, v_lo:v_lo + head_dim]          # (T, D) bf16

        # Flash-style online softmax over KV blocks: the score buffer is
        # capped at (tq, tk) f32 instead of (tq, T).
        m_i = jnp.full((tq, 1), -jnp.inf, jnp.float32)
        l_i = jnp.zeros((tq, 1), jnp.float32)
        acc_h = jnp.zeros((tq, head_dim), jnp.float32)
        for j in range(n_kv):
            kh = kh_full[j * tk:(j + 1) * tk, :]                 # (tk, D)
            vh = vh_full[j * tk:(j + 1) * tk, :]                 # (tk, D)
            # scores = q @ k^T * scale (bf16 operands, f32 MXU accumulation)
            s = lax.dot_general(qh, kh, (((1,), (1,)), ((), ())),
                                preferred_element_type=jnp.float32) * scale
            m_new = jnp.maximum(m_i, jnp.max(s, axis=-1, keepdims=True))
            alpha = jnp.exp(m_i - m_new)
            p = jnp.exp(s - m_new)                               # (tq, tk)
            l_i = alpha * l_i + jnp.sum(p, axis=-1, keepdims=True)
            acc_h = alpha * acc_h + jnp.dot(p.astype(jnp.bfloat16), vh,
                                            preferred_element_type=jnp.float32)
            m_i = m_new

        # Deferred normalization: one EUP reciprocal + O(tq*D) multiply
        # instead of an O(tq*T) VPU divide.
        yh = acc_h * pl.reciprocal(l_i, approx=True)             # (tq, D) f32

        # Fold the head-concat into the output projection:
        #   y @ W_out.T == sum_h y_h @ W_out.T[h*D:(h+1)*D, :]
        acc = acc + jnp.dot(yh.astype(jnp.bfloat16),
                            w_out_ref[q_lo:q_lo + head_dim, :],
                            preferred_element_type=jnp.float32)  # (tq, C)

    out_ref[0] = (acc + b_out_ref[...]).astype(out_ref.dtype)


def _self_attention_forward(x, w_in, b_in, w_out, b_out, *, n_head, kv_heads,
                            tq=None, tk=None):
    """x: (B, T, C); w_in: (C + 2*kv_heads*D, C) fused [q;k;v] weight,
    w_out: (C, C). Returns (B, T, C)."""
    B, T, C = x.shape
    assert C % n_head == 0
    head_dim = C // n_head
    in_dim = C + 2 * kv_heads * head_dim
    scale = 1.0 / math.sqrt(head_dim)

    tq = _pick_tile(T, 256) if tq is None else tq
    tk = _pick_tile(T, 512) if tk is None else tk
    assert T % tq == 0 and T % tk == 0
    n_q = T // tq

    # Weights: transpose + cast to bf16 ONCE in the wrapper so the kernel
    # feeds bf16 straight to the MXU (f32 accumulation) with zero in-kernel
    # weight casts / transposes.
    w_in_t = jnp.asarray(w_in).T.astype(jnp.bfloat16)        # (C, in_dim)
    w_out_t = jnp.asarray(w_out).T.astype(jnp.bfloat16)      # (C, C)
    b_in2 = jnp.asarray(b_in, jnp.float32).reshape(1, in_dim)
    b_out2 = jnp.asarray(b_out, jnp.float32).reshape(1, C)

    kernel = functools.partial(
        _self_attention_kernel, n_head=n_head, head_dim=head_dim,
        kv_heads=kv_heads, scale=scale, tq=tq, tk=tk)

    # Explicit VMEM budget (v7x: 64 MiB physical / 32 MiB scoped default;
    # v5e scoped default is only 16 MiB). Generous padding + 3x headroom.
    def _tile_bytes(r, c, itemsize):
        return (-(-max(r, 1) // 8) * 8) * (-(-max(c, 1) // 128) * 128) * itemsize

    xb = jnp.dtype(x.dtype).itemsize
    est = (2 * _tile_bytes(T, C, xb)                              # x block
           + 2 * _tile_bytes(tq, C, xb)                           # out block
           + 2 * (_tile_bytes(C, in_dim, 2) + _tile_bytes(C, C, 2))   # weights
           + 2 * (_tile_bytes(1, in_dim, 4) + _tile_bytes(1, C, 4))   # biases
           + _tile_bytes(T, in_dim, 2)                            # proj scratch
           + 4 * _tile_bytes(tq, tk, 4)                           # score temps
           + 2 * _tile_bytes(tq, C, 4)                            # out-proj acc
           + 4 * _tile_bytes(T, head_dim, 2)                      # K/V copies
           + 4 * _tile_bytes(tq, head_dim, 4))                    # PV acc
    vmem_limit = int(min(max(3 * est, 16 * 1024 * 1024), 48 * 1024 * 1024))

    def _run(single_buffer_weights):
        if single_buffer_weights:
            # Grid-invariant weights/biases: a second pipeline buffer is pure
            # VMEM waste, so request single buffering.
            def wspec(shape):
                return pl.BlockSpec(shape, lambda b, q: (0,) * len(shape),
                                    pipeline_mode=pl.Buffered(buffer_count=1))
        else:
            def wspec(shape):
                return pl.BlockSpec(shape, lambda b, q: (0,) * len(shape))

        return pl.pallas_call(
            kernel,
            out_shape=jax.ShapeDtypeStruct((B, T, C), x.dtype),
            grid=(B, n_q),
            in_specs=[
                pl.BlockSpec((1, T, C), lambda b, q: (b, 0, 0)),
                wspec((C, in_dim)),
                wspec((1, in_dim)),
                wspec((C, C)),
                wspec((1, C)),
            ],
            out_specs=pl.BlockSpec((1, tq, C), lambda b, q: (b, q, 0)),
            scratch_shapes=[pltpu.VMEM((T, in_dim), jnp.bfloat16)],
            compiler_params=pltpu.CompilerParams(
                # batch axis -> megacore / dual-TC; query-tile axis stays
                # "arbitrary" so the qi==0 projection step precedes its tiles.
                dimension_semantics=("parallel", "arbitrary"),
                vmem_limit_bytes=vmem_limit),
        )(x, w_in_t, b_in2, w_out_t, b_out2)

    try:
        return _run(True)
    except Exception:
        # pl.Buffered(1) unsupported on this jax/libtpu -> default buffering.
        return _run(False)


def multi_head_attention(x, w_attn, b_attn, w_proj, b_proj, *, n_head,
                         tq=None, tk=None):
    """MultiHeadAttention.forward (eval mode, mask=None).
    w_attn: (3C, C) = c_attn.weight, w_proj: (C, C) = c_proj.weight."""
    return _self_attention_forward(x, w_attn, b_attn, w_proj, b_proj,
                                   n_head=n_head, kv_heads=n_head, tq=tq, tk=tk)


def multi_query_attention(x, w_q, b_q, w_kv, b_kv, w_out, b_out, *, n_head,
                          tq=None, tk=None):
    """MultiQueryAttention.forward (eval mode, mask=None).
    w_q: (C, C), w_kv: (2*C//n_head, C), w_out: (C, C)."""
    # Fuse q_proj and kv_proj into a single input matmul.
    w_in = jnp.concatenate([jnp.asarray(w_q), jnp.asarray(w_kv)], axis=0)
    b_in = jnp.concatenate([jnp.asarray(b_q), jnp.asarray(b_kv)], axis=0)
    return _self_attention_forward(x, w_in, b_in, w_out, b_out,
                                   n_head=n_head, kv_heads=1, tq=tq, tk=tk)


# ----------------------------- plain-JAX references -------------------------


def _mha_reference(x, w_attn, b_attn, w_proj, b_proj, *, n_head):
    B, T, C = x.shape
    D = C // n_head
    qkv = x @ w_attn.T + b_attn
    q, k, v = jnp.split(qkv, 3, axis=-1)
    q = q.reshape(B, T, n_head, D).transpose(0, 2, 1, 3)
    k = k.reshape(B, T, n_head, D).transpose(0, 2, 1, 3)
    v = v.reshape(B, T, n_head, D).transpose(0, 2, 1, 3)
    s = jnp.einsum('bhtd,bhsd->bhts', q, k) / math.sqrt(D)
    p = jax.nn.softmax(s, axis=-1)
    y = jnp.einsum('bhts,bhsd->bhtd', p, v)
    y = y.transpose(0, 2, 1, 3).reshape(B, T, C)
    return y @ w_proj.T + b_proj


def _mqa_reference(x, w_q, b_q, w_kv, b_kv, w_out, b_out, *, n_head):
    B, T, C = x.shape
    D = C // n_head
    q = x @ w_q.T + b_q
    kv = x @ w_kv.T + b_kv
    k, v = jnp.split(kv, 2, axis=-1)                  # (B, T, D) each
    q = q.reshape(B, T, n_head, D).transpose(0, 2, 1, 3)
    s = jnp.einsum('bhtd,bsd->bhts', q, k) / math.sqrt(D)
    p = jax.nn.softmax(s, axis=-1)
    y = jnp.einsum('bhts,bsd->bhtd', p, v)
    y = y.transpose(0, 2, 1, 3).reshape(B, T, C)
    return y @ w_out.T + b_out


if __name__ == "__main__":
    B, T, C = 2, 8, 32          # batch=2, seq=8, n_embd=32
    n_head = 4
    head_dim = C // n_head

    key = jax.random.PRNGKey(0)
    keys = jax.random.split(key, 10)

    x = jax.random.normal(keys[0], (B, T, C), dtype=jnp.float32)

    def uinit(k, shape, fan_in):
        bound = 1.0 / math.sqrt(fan_in)
        return jax.random.uniform(k, shape, jnp.float32, -bound, bound)

    # ---- MultiHeadAttention parameters (nn.Linear-style init) ----
    w_attn = uinit(keys[1], (3 * C, C), C)
    b_attn = uinit(keys[2], (3 * C,), C)
    w_proj = uinit(keys[3], (C, C), C)
    b_proj = uinit(keys[4], (C,), C)

    out_mha = multi_head_attention(x, w_attn, b_attn, w_proj, b_proj,
                                   n_head=n_head)
    out_mha = jax.block_until_ready(out_mha)
    ref_mha = _mha_reference(x, w_attn, b_attn, w_proj, b_proj, n_head=n_head)
    assert out_mha.shape == (B, T, C)
    # bf16 MXU operands -> looser tolerance than the old all-f32 kernel.
    np.testing.assert_allclose(np.asarray(out_mha), np.asarray(ref_mha),
                               rtol=3e-2, atol=3e-2)

    # ---- MultiQueryAttention parameters ----
    w_q = uinit(keys[5], (C, C), C)
    b_q = uinit(keys[6], (C,), C)
    w_kv = uinit(keys[7], (2 * head_dim, C), C)
    b_kv = uinit(keys[8], (2 * head_dim,), C)
    w_out = uinit(keys[9], (C, C), C)
    b_out = jnp.zeros((C,), jnp.float32)

    out_mqa = multi_query_attention(x, w_q, b_q, w_kv, b_kv, w_out, b_out,
                                    n_head=n_head)
    out_mqa = jax.block_until_ready(out_mqa)
    ref_mqa = _mqa_reference(x, w_q, b_q, w_kv, b_kv, w_out, b_out,
                             n_head=n_head)
    assert out_mqa.shape == (B, T, C)
    np.testing.assert_allclose(np.asarray(out_mqa), np.asarray(ref_mqa),
                               rtol=3e-2, atol=3e-2)

    # ---- exercise the flash-style path: 4 query tiles x 2 KV blocks --------
    T2 = 32
    x2 = jax.random.normal(jax.random.PRNGKey(1), (B, T2, C), dtype=jnp.float32)
    out2 = multi_head_attention(x2, w_attn, b_attn, w_proj, b_proj,
                                n_head=n_head, tq=8, tk=16)
    out2 = jax.block_until_ready(out2)
    ref2 = _mha_reference(x2, w_attn, b_attn, w_proj, b_proj, n_head=n_head)
    np.testing.assert_allclose(np.asarray(out2), np.asarray(ref2),
                               rtol=3e-2, atol=3e-2)

    print("KERNEL_OK")
</pallas_src>

<mosaic_0001>
module attributes {stable_mosaic.version = 11 : i64} {
  func.func @_self_attention_kernel(%arg0: i32, %arg1: i32, %arg2: memref<1x8x32xf32, #tpu.memory_space<vmem>>, %arg3: memref<32x96xbf16, #tpu.memory_space<vmem>>, %arg4: memref<1x96xf32, #tpu.memory_space<vmem>>, %arg5: memref<32x32xbf16, #tpu.memory_space<vmem>>, %arg6: memref<1x32xf32, #tpu.memory_space<vmem>>, %arg7: memref<1x8x32xf32, #tpu.memory_space<vmem>>, %arg8: memref<8x96xbf16, #tpu.memory_space<vmem>>) attributes {dimension_semantics = [#tpu.dimension_semantics<parallel>, #tpu.dimension_semantics<arbitrary>], iteration_bounds = array<i64: 2, 1>, scalar_prefetch = 0 : i64, scratch_operands = 1 : i64, tpu.core_type = #tpu.core_type<tc>, window_params = [{transform_indices = @transform_0, window_bounds = array<i64: 1, 8, 32>}, {pipeline_mode = #tpu.pipeline_mode<synchronous>, transform_indices = @transform_1, window_bounds = array<i64: 32, 96>}, {pipeline_mode = #tpu.pipeline_mode<synchronous>, transform_indices = @transform_2, window_bounds = array<i64: 1, 96>}, {pipeline_mode = #tpu.pipeline_mode<synchronous>, transform_indices = @transform_3, window_bounds = array<i64: 32, 32>}, {pipeline_mode = #tpu.pipeline_mode<synchronous>, transform_indices = @transform_4, window_bounds = array<i64: 1, 32>}, {transform_indices = @transform_5, window_bounds = array<i64: 1, 8, 32>}]} {
    %c0_i32 = arith.constant 0 : i32
    %0 = arith.cmpi eq, %arg1, %c0_i32 : i32
    %1 = arith.extui %0 : i1 to i32
    %c0_i32_0 = arith.constant 0 : i32
    %2 = arith.cmpi ne, %1, %c0_i32_0 : i32
    scf.if %2 {
      %c0_58 = arith.constant 0 : index
      %c0_59 = arith.constant 0 : index
      %c0_60 = arith.constant 0 : index
      %148 = vector.load %arg2[%c0_58, %c0_59, %c0_60] : memref<1x8x32xf32, #tpu.memory_space<vmem>>, vector<1x8x32xf32>
      %149 = vector.shape_cast %148 : vector<1x8x32xf32> to vector<8x32xf32>
      %150 = arith.truncf %149 : vector<8x32xf32> to vector<8x32xbf16>
      %c0_61 = arith.constant 0 : index
      %c0_62 = arith.constant 0 : index
      %151 = vector.load %arg3[%c0_61, %c0_62] : memref<32x96xbf16, #tpu.memory_space<vmem>>, vector<32x96xbf16>
      %cst_63 = arith.constant dense<0.000000e+00> : vector<8x96xf32>
      %152 = tpu.matmul %150, %151, %cst_63 {dimension_numbers = #tpu.dot_dimension_numbers<[1], [0], [0], [1], [0, 0, 1, 1], [], []>} : vector<8x32xbf16>, vector<32x96xbf16>, vector<8x96xf32> -> vector<8x96xf32>
      %c0_64 = arith.constant 0 : index
      %c0_65 = arith.constant 0 : index
      %153 = vector.load %arg4[%c0_64, %c0_65] : memref<1x96xf32, #tpu.memory_space<vmem>>, vector<1x96xf32>
      %154 = vector.broadcast %153 : vector<1x96xf32> to vector<8x96xf32>
      %155 = arith.addf %152, %154 : vector<8x96xf32>
      %156 = arith.truncf %155 : vector<8x96xf32> to vector<8x96xbf16>
      %c0_66 = arith.constant 0 : index
      %c0_67 = arith.constant 0 : index
      %157 = vector.load %arg8[%c0_66, %c0_67] : memref<8x96xbf16, #tpu.memory_space<vmem>>, vector<8x96xbf16>
      tpu.vector_store %arg8[%c0_66, %c0_67], %156 {strides = array<i32>} : memref<8x96xbf16, #tpu.memory_space<vmem>>, vector<8x96xbf16>,
    } else {
    }
    %c8_i32 = arith.constant 8 : i32
    %3 = arith.muli %arg1, %c8_i32 : i32
    %4 = tpu.assume_multiple %3, 8 : i32
    %cst = arith.constant 0.000000e+00 : f32
    %5 = vector.broadcast %cst : f32 to vector<8x32xf32>
    %6 = arith.index_cast %4 : i32 to index
    %c0 = arith.constant 0 : index
    %7 = vector.load %arg8[%6, %c0] : memref<8x96xbf16, #tpu.memory_space<vmem>>, vector<8x8xbf16>
    %c0_1 = arith.constant 0 : index
    %c32 = arith.constant 32 : index
    %8 = vector.load %arg8[%c0_1, %c32] : memref<8x96xbf16, #tpu.memory_space<vmem>>, vector<8x8xbf16>
    %c0_2 = arith.constant 0 : index
    %c64 = arith.constant 64 : index
    %9 = vector.load %arg8[%c0_2, %c64] : memref<8x96xbf16, #tpu.memory_space<vmem>>, vector<8x8xbf16>
    %cst_3 = arith.constant 0xFF800000 : f32
    %10 = vector.broadcast %cst_3 : f32 to vector<8x1xf32>
    %cst_4 = arith.constant 0.000000e+00 : f32
    %11 = vector.broadcast %cst_4 : f32 to vector<8x1xf32>
    %cst_5 = arith.constant 0.000000e+00 : f32
    %12 = vector.broadcast %cst_5 : f32 to vector<8x8xf32>
    %cst_6 = arith.constant dense<0.000000e+00> : vector<8x8xf32>
    %13 = tpu.matmul %7, %8, %cst_6 {dimension_numbers = #tpu.dot_dimension_numbers<[1], [1], [0], [0], [0, 0, 1, 0], [], []>} : vector<8x8xbf16>, vector<8x8xbf16>, vector<8x8xf32> -> vector<8x8xf32>
    %cst_7 = arith.constant 0.353553385 : f32
    %14 = vector.broadcast %cst_7 : f32 to vector<8x8xf32>
    %15 = arith.mulf %13, %14 : vector<8x8xf32>
    %cst_8 = arith.constant dense<0xFF800000> : vector<8xf32>
    %16 = vector.multi_reduction <maximumf>, %15, %cst_8 [1] : vector<8x8xf32> to vector<8xf32>
    %17 = vector.shape_cast %16 : vector<8xf32> to vector<8x1xf32>
    %18 = arith.maximumf %10, %17 : vector<8x1xf32>
    %19 = arith.subf %10, %18 : vector<8x1xf32>
    %20 = math.exp %19 : vector<8x1xf32>
    %21 = vector.broadcast %18 : vector<8x1xf32> to vector<8x8xf32>
    %22 = arith.subf %15, %21 : vector<8x8xf32>
    %23 = math.exp %22 : vector<8x8xf32>
    %24 = arith.mulf %20, %11 : vector<8x1xf32>
    %cst_9 = arith.constant dense<0.000000e+00> : vector<8xf32>
    %25 = vector.multi_reduction <add>, %23, %cst_9 [1] : vector<8x8xf32> to vector<8xf32>
    %26 = vector.shape_cast %25 : vector<8xf32> to vector<8x1xf32>
    %27 = arith.addf %24, %26 : vector<8x1xf32>
    %28 = vector.broadcast %20 : vector<8x1xf32> to vector<8x8xf32>
    %29 = arith.mulf %28, %12 : vector<8x8xf32>
    %30 = arith.truncf %23 : vector<8x8xf32> to vector<8x8xbf16>
    %cst_10 = arith.constant dense<0.000000e+00> : vector<8x8xf32>
    %31 = tpu.matmul %30, %9, %cst_10 {dimension_numbers = #tpu.dot_dimension_numbers<[1], [0], [0], [1], [0, 0, 1, 1], [], []>} : vector<8x8xbf16>, vector<8x8xbf16>, vector<8x8xf32> -> vector<8x8xf32>
    %32 = arith.addf %29, %31 : vector<8x8xf32>
    %33 = tpu.reciprocal %27 {approx = true} : vector<8x1xf32> -> vector<8x1xf32>
    %34 = vector.broadcast %33 : vector<8x1xf32> to vector<8x8xf32>
    %35 = arith.mulf %32, %34 : vector<8x8xf32>
    %36 = arith.truncf %35 : vector<8x8xf32> to vector<8x8xbf16>
    %c0_11 = arith.constant 0 : index
    %c0_12 = arith.constant 0 : index
    %37 = vector.load %arg5[%c0_11, %c0_12] : memref<32x32xbf16, #tpu.memory_space<vmem>>, vector<8x32xbf16>
    %cst_13 = arith.constant dense<0.000000e+00> : vector<8x32xf32>
    %38 = tpu.matmul %36, %37, %cst_13 {dimension_numbers = #tpu.dot_dimension_numbers<[1], [0], [0], [1], [0, 0, 1, 1], [], []>} : vector<8x8xbf16>, vector<8x32xbf16>, vector<8x32xf32> -> vector<8x32xf32>
    %39 = arith.addf %5, %38 : vector<8x32xf32>
    %40 = arith.index_cast %4 : i32 to index
    %c8 = arith.constant 8 : index
    %41 = vector.load %arg8[%40, %c8] : memref<8x96xbf16, #tpu.memory_space<vmem>>, vector<8x8xbf16>
    %c0_14 = arith.constant 0 : index
    %c40 = arith.constant 40 : index
    %42 = vector.load %arg8[%c0_14, %c40] : memref<8x96xbf16, #tpu.memory_space<vmem>>, vector<8x8xbf16>
    %c0_15 = arith.constant 0 : index
    %c72 = arith.constant 72 : index
    %43 = vector.load %arg8[%c0_15, %c72] : memref<8x96xbf16, #tpu.memory_space<vmem>>, vector<8x8xbf16>
    %cst_16 = arith.constant 0xFF800000 : f32
    %44 = vector.broadcast %cst_16 : f32 to vector<8x1xf32>
    %cst_17 = arith.constant 0.000000e+00 : f32
    %45 = vector.broadcast %cst_17 : f32 to vector<8x1xf32>
    %cst_18 = arith.constant 0.000000e+00 : f32
    %46 = vector.broadcast %cst_18 : f32 to vector<8x8xf32>
    %cst_19 = arith.constant dense<0.000000e+00> : vector<8x8xf32>
    %47 = tpu.matmul %41, %42, %cst_19 {dimension_numbers = #tpu.dot_dimension_numbers<[1], [1], [0], [0], [0, 0, 1, 0], [], []>} : vector<8x8xbf16>, vector<8x8xbf16>, vector<8x8xf32> -> vector<8x8xf32>
    %cst_20 = arith.constant 0.353553385 : f32
    %48 = vector.broadcast %cst_20 : f32 to vector<8x8xf32>
    %49 = arith.mulf %47, %48 : vector<8x8xf32>
    %cst_21 = arith.constant dense<0xFF800000> : vector<8xf32>
    %50 = vector.multi_reduction <maximumf>, %49, %cst_21 [1] : vector<8x8xf32> to vector<8xf32>
    %51 = vector.shape_cast %50 : vector<8xf32> to vector<8x1xf32>
    %52 = arith.maximumf %44, %51 : vector<8x1xf32>
    %53 = arith.subf %44, %52 : vector<8x1xf32>
    %54 = math.exp %53 : vector<8x1xf32>
    %55 = vector.broadcast %52 : vector<8x1xf32> to vector<8x8xf32>
    %56 = arith.subf %49, %55 : vector<8x8xf32>
    %57 = math.exp %56 : vector<8x8xf32>
    %58 = arith.mulf %54, %45 : vector<8x1xf32>
    %cst_22 = arith.constant dense<0.000000e+00> : vector<8xf32>
    %59 = vector.multi_reduction <add>, %57, %cst_22 [1] : vector<8x8xf32> to vector<8xf32>
    %60 = vector.shape_cast %59 : vector<8xf32> to vector<8x1xf32>
    %61 = arith.addf %58, %60 : vector<8x1xf32>
    %62 = vector.broadcast %54 : vector<8x1xf32> to vector<8x8xf32>
    %63 = arith.mulf %62, %46 : vector<8x8xf32>
    %64 = arith.truncf %57 : vector<8x8xf32> to vector<8x8xbf16>
    %cst_23 = arith.constant dense<0.000000e+00> : vector<8x8xf32>
    %65 = tpu.matmul %64, %43, %cst_23 {dimension_numbers = #tpu.dot_dimension_numbers<[1], [0], [0], [1], [0, 0, 1, 1], [], []>} : vector<8x8xbf16>, vector<8x8xbf16>, vector<8x8xf32> -> vector<8x8xf32>
    %66 = arith.addf %63, %65 : vector<8x8xf32>
    %67 = tpu.reciprocal %61 {approx = true} : vector<8x1xf32> -> vector<8x1xf32>
    %68 = vector.broadcast %67 : vector<8x1xf32> to vector<8x8xf32>
    %69 = arith.mulf %66, %68 : vector<8x8xf32>
    %70 = arith.truncf %69 : vector<8x8xf32> to vector<8x8xbf16>
    %c8_24 = arith.constant 8 : index
    %c0_25 = arith.constant 0 : index
    %71 = vector.load %arg5[%c8_24, %c0_25] : memref<32x32xbf16, #tpu.memory_space<vmem>>, vector<8x32xbf16>
    %cst_26 = arith.constant dense<0.000000e+00> : vector<8x32xf32>
    %72 = tpu.matmul %70, %71, %cst_26 {dimension_numbers = #tpu.dot_dimension_numbers<[1], [0], [0], [1], [0, 0, 1, 1], [], []>} : vector<8x8xbf16>, vector<8x32xbf16>, vector<8x32xf32> -> vector<8x32xf32>
    %73 = arith.addf %39, %72 : vector<8x32xf32>
    %74 = arith.index_cast %4 : i32 to index
    %c16 = arith.constant 16 : index
    %75 = vector.load %arg8[%74, %c16] : memref<8x96xbf16, #tpu.memory_space<vmem>>, vector<8x8xbf16>
    %c0_27 = arith.constant 0 : index
    %c48 = arith.constant 48 : index
    %76 = vector.load %arg8[%c0_27, %c48] : memref<8x96xbf16, #tpu.memory_space<vmem>>, vector<8x8xbf16>
    %c0_28 = arith.constant 0 : index
    %c80 = arith.constant 80 : index
    %77 = vector.load %arg8[%c0_28, %c80] : memref<8x96xbf16, #tpu.memory_space<vmem>>, vector<8x8xbf16>
    %cst_29 = arith.constant 0xFF800000 : f32
    %78 = vector.broadcast %cst_29 : f32 to vector<8x1xf32>
    %cst_30 = arith.constant 0.000000e+00 : f32
    %79 = vector.broadcast %cst_30 : f32 to vector<8x1xf32>
    %cst_31 = arith.constant 0.000000e+00 : f32
    %80 = vector.broadcast %cst_31 : f32 to vector<8x8xf32>
    %cst_32 = arith.constant dense<0.000000e+00> : vector<8x8xf32>
    %81 = tpu.matmul %75, %76, %cst_32 {dimension_numbers = #tpu.dot_dimension_numbers<[1], [1], [0], [0], [0, 0, 1, 0], [], []>} : vector<8x8xbf16>, vector<8x8xbf16>, vector<8x8xf32> -> vector<8x8xf32>
    %cst_33 = arith.constant 0.353553385 : f32
    %82 = vector.broadcast %cst_33 : f32 to vector<8x8xf32>
    %83 = arith.mulf %81, %82 : vector<8x8xf32>
    %cst_34 = arith.constant dense<0xFF800000> : vector<8xf32>
    %84 = vector.multi_reduction <maximumf>, %83, %cst_34 [1] : vector<8x8xf32> to vector<8xf32>
    %85 = vector.shape_cast %84 : vector<8xf32> to vector<8x1xf32>
    %86 = arith.maximumf %78, %85 : vector<8x1xf32>
    %87 = arith.subf %78, %86 : vector<8x1xf32>
    %88 = math.exp %87 : vector<8x1xf32>
    %89 = vector.broadcast %86 : vector<8x1xf32> to vector<8x8xf32>
    %90 = arith.subf %83, %89 : vector<8x8xf32>
    %91 = math.exp %90 : vector<8x8xf32>
    %92 = arith.mulf %88, %79 : vector<8x1xf32>
    %cst_35 = arith.constant dense<0.000000e+00> : vector<8xf32>
    %93 = vector.multi_reduction <add>, %91, %cst_35 [1] : vector<8x8xf32> to vector<8xf32>
    %94 = vector.shape_cast %93 : vector<8xf32> to vector<8x1xf32>
    %95 = arith.addf %92, %94 : vector<8x1xf32>
    %96 = vector.broadcast %88 : vector<8x1xf32> to vector<8x8xf32>
    %97 = arith.mulf %96, %80 : vector<8x8xf32>
    %98 = arith.truncf %91 : vector<8x8xf32> to vector<8x8xbf16>
    %cst_36 = arith.constant dense<0.000000e+00> : vector<8x8xf32>
    %99 = tpu.matmul %98, %77, %cst_36 {dimension_numbers = #tpu.dot_dimension_numbers<[1], [0], [0], [1], [0, 0, 1, 1], [], []>} : vector<8x8xbf16>, vector<8x8xbf16>, vector<8x8xf32> -> vector<8x8xf32>
    %100 = arith.addf %97, %99 : vector<8x8xf32>
    %101 = tpu.reciprocal %95 {approx = true} : vector<8x1xf32> -> vector<8x1xf32>
    %102 = vector.broadcast %101 : vector<8x1xf32> to vector<8x8xf32>
    %103 = arith.mulf %100, %102 : vector<8x8xf32>
    %104 = arith.truncf %103 : vector<8x8xf32> to vector<8x8xbf16>
    %c16_37 = arith.constant 16 : index
    %c0_38 = arith.constant 0 : index
    %105 = vector.load %arg5[%c16_37, %c0_38] : memref<32x32xbf16, #tpu.memory_space<vmem>>, vector<8x32xbf16>
    %cst_39 = arith.constant dense<0.000000e+00> : vector<8x32xf32>
    %106 = tpu.matmul %104, %105, %cst_39 {dimension_numbers = #tpu.dot_dimension_numbers<[1], [0], [0], [1], [0, 0, 1, 1], [], []>} : vector<8x8xbf16>, vector<8x32xbf16>, vector<8x32xf32> -> vector<8x32xf32>
    %107 = arith.addf %73, %106 : vector<8x32xf32>
    %108 = arith.index_cast %4 : i32 to index
    %c24 = arith.constant 24 : index
    %109 = vector.load %arg8[%108, %c24] : memref<8x96xbf16, #tpu.memory_space<vmem>>, vector<8x8xbf16>
    %c0_40 = arith.constant 0 : index
    %c56 = arith.constant 56 : index
    %110 = vector.load %arg8[%c0_40, %c56] : memref<8x96xbf16, #tpu.memory_space<vmem>>, vector<8x8xbf16>
    %c0_41 = arith.constant 0 : index
    %c88 = arith.constant 88 : index
    %111 = vector.load %arg8[%c0_41, %c88] : memref<8x96xbf16, #tpu.memory_space<vmem>>, vector<8x8xbf16>
    %cst_42 = arith.constant 0xFF800000 : f32
    %112 = vector.broadcast %cst_42 : f32 to vector<8x1xf32>
    %cst_43 = arith.constant 0.000000e+00 : f32
    %113 = vector.broadcast %cst_43 : f32 to vector<8x1xf32>
    %cst_44 = arith.constant 0.000000e+00 : f32
    %114 = vector.broadcast %cst_44 : f32 to vector<8x8xf32>
    %cst_45 = arith.constant dense<0.000000e+00> : vector<8x8xf32>
    %115 = tpu.matmul %109, %110, %cst_45 {dimension_numbers = #tpu.dot_dimension_numbers<[1], [1], [0], [0], [0, 0, 1, 0], [], []>} : vector<8x8xbf16>, vector<8x8xbf16>, vector<8x8xf32> -> vector<8x8xf32>
    %cst_46 = arith.constant 0.353553385 : f32
    %116 = vector.broadcast %cst_46 : f32 to vector<8x8xf32>
    %117 = arith.mulf %115, %116 : vector<8x8xf32>
    %cst_47 = arith.constant dense<0xFF800000> : vector<8xf32>
    %118 = vector.multi_reduction <maximumf>, %117, %cst_47 [1] : vector<8x8xf32> to vector<8xf32>
    %119 = vector.shape_cast %118 : vector<8xf32> to vector<8x1xf32>
    %120 = arith.maximumf %112, %119 : vector<8x1xf32>
    %121 = arith.subf %112, %120 : vector<8x1xf32>
    %122 = math.exp %121 : vector<8x1xf32>
    %123 = vector.broadcast %120 : vector<8x1xf32> to vector<8x8xf32>
    %124 = arith.subf %117, %123 : vector<8x8xf32>
    %125 = math.exp %124 : vector<8x8xf32>
    %126 = arith.mulf %122, %113 : vector<8x1xf32>
    %cst_48 = arith.constant dense<0.000000e+00> : vector<8xf32>
    %127 = vector.multi_reduction <add>, %125, %cst_48 [1] : vector<8x8xf32> to vector<8xf32>
    %128 = vector.shape_cast %127 : vector<8xf32> to vector<8x1xf32>
    %129 = arith.addf %126, %128 : vector<8x1xf32>
    %130 = vector.broadcast %122 : vector<8x1xf32> to vector<8x8xf32>
    %131 = arith.mulf %130, %114 : vector<8x8xf32>
    %132 = arith.truncf %125 : vector<8x8xf32> to vector<8x8xbf16>
    %cst_49 = arith.constant dense<0.000000e+00> : vector<8x8xf32>
    %133 = tpu.matmul %132, %111, %cst_49 {dimension_numbers = #tpu.dot_dimension_numbers<[1], [0], [0], [1], [0, 0, 1, 1], [], []>} : vector<8x8xbf16>, vector<8x8xbf16>, vector<8x8xf32> -> vector<8x8xf32>
    %134 = arith.addf %131, %133 : vector<8x8xf32>
    %135 = tpu.reciprocal %129 {approx = true} : vector<8x1xf32> -> vector<8x1xf32>
    %136 = vector.broadcast %135 : vector<8x1xf32> to vector<8x8xf32>
    %137 = arith.mulf %134, %136 : vector<8x8xf32>
    %138 = arith.truncf %137 : vector<8x8xf32> to vector<8x8xbf16>
    %c24_50 = arith.constant 24 : index
    %c0_51 = arith.constant 0 : index
    %139 = vector.load %arg5[%c24_50, %c0_51] : memref<32x32xbf16, #tpu.memory_space<vmem>>, vector<8x32xbf16>
    %cst_52 = arith.constant dense<0.000000e+00> : vector<8x32xf32>
    %140 = tpu.matmul %138, %139, %cst_52 {dimension_numbers = #tpu.dot_dimension_numbers<[1], [0], [0], [1], [0, 0, 1, 1], [], []>} : vector<8x8xbf16>, vector<8x32xbf16>, vector<8x32xf32> -> vector<8x32xf32>
    %141 = arith.addf %107, %140 : vector<8x32xf32>
    %c0_53 = arith.constant 0 : index
    %c0_54 = arith.constant 0 : index
    %142 = vector.load %arg6[%c0_53, %c0_54] : memref<1x32xf32, #tpu.memory_space<vmem>>, vector<1x32xf32>
    %143 = vector.broadcast %142 : vector<1x32xf32> to vector<8x32xf32>
    %144 = arith.addf %141, %143 : vector<8x32xf32>
    %c0_55 = arith.constant 0 : index
    %c0_56 = arith.constant 0 : index
    %c0_57 = arith.constant 0 : index
    %145 = vector.load %arg7[%c0_55, %c0_56, %c0_57] : memref<1x8x32xf32, #tpu.memory_space<vmem>>, vector<1x8x32xf32>
    %146 = vector.shape_cast %145 : vector<1x8x32xf32> to vector<8x32xf32>
    %147 = vector.shape_cast %144 : vector<8x32xf32> to vector<1x8x32xf32>
    tpu.vector_store %arg7[%c0_55, %c0_56, %c0_57], %147 {strides = array<i32>} : memref<1x8x32xf32, #tpu.memory_space<vmem>>, vector<1x8x32xf32>,
    return
  }
  func.func @transform_0(%arg0: i32, %arg1: i32) -> (i32, i32, i32) {
    %c0_i32 = arith.constant 0 : i32
    %c0_i32_0 = arith.constant 0 : i32
    %c0_i32_1 = arith.constant 0 : i32
    return %arg0, %c0_i32, %c0_i32_0 : i32, i32, i32
  }
  func.func @transform_1(%arg0: i32, %arg1: i32) -> (i32, i32) {
    %c0_i32 = arith.constant 0 : i32
    %c0_i32_0 = arith.constant 0 : i32
    %c0_i32_1 = arith.constant 0 : i32
    return %c0_i32, %c0_i32_0 : i32, i32
  }
  func.func @transform_2(%arg0: i32, %arg1: i32) -> (i32, i32) {
    %c0_i32 = arith.constant 0 : i32
    %c0_i32_0 = arith.constant 0 : i32
    %c0_i32_1 = arith.constant 0 : i32
    return %c0_i32, %c0_i32_0 : i32, i32
  }
  func.func @transform_3(%arg0: i32, %arg1: i32) -> (i32, i32) {
    %c0_i32 = arith.constant 0 : i32
    %c0_i32_0 = arith.constant 0 : i32
    %c0_i32_1 = arith.constant 0 : i32
    return %c0_i32, %c0_i32_0 : i32, i32
  }
  func.func @transform_4(%arg0: i32, %arg1: i32) -> (i32, i32) {
    %c0_i32 = arith.constant 0 : i32
    %c0_i32_0 = arith.constant 0 : i32
    %c0_i32_1 = arith.constant 0 : i32
    return %c0_i32, %c0_i32_0 : i32, i32
  }
  func.func @transform_5(%arg0: i32, %arg1: i32) -> (i32, i32, i32) {
    %c0_i32 = arith.constant 0 : i32
    %c0_i32_0 = arith.constant 0 : i32
    return %arg0, %arg1, %c0_i32 : i32, i32, i32
  }
}

module attributes {stable_mosaic.version = 11 : i64} {
  func.func @_self_attention_kernel(%arg0: i32, %arg1: i32, %arg2: memref<1x8x32xf32, #tpu.memory_space<vmem>>, %arg3: memref<32x96xbf16, #tpu.memory_space<vmem>>, %arg4: memref<1x96xf32, #tpu.memory_space<vmem>>, %arg5: memref<32x32xbf16, #tpu.memory_space<vmem>>, %arg6: memref<1x32xf32, #tpu.memory_space<vmem>>, %arg7: memref<1x8x32xf32, #tpu.memory_space<vmem>>, %arg8: memref<8x96xbf16, #tpu.memory_space<vmem>>) attributes {dimension_semantics = [#tpu.dimension_semantics<parallel>, #tpu.dimension_semantics<arbitrary>], iteration_bounds = array<i64: 2, 1>, scalar_prefetch = 0 : i64, scratch_operands = 1 : i64, tpu.core_type = #tpu.core_type<tc>, window_params = [{transform_indices = @transform_0, window_bounds = array<i64: 1, 8, 32>}, {pipeline_mode = #tpu.pipeline_mode<synchronous>, transform_indices = @transform_1, window_bounds = array<i64: 32, 96>}, {pipeline_mode = #tpu.pipeline_mode<synchronous>, transform_indices = @transform_2, window_bounds = array<i64: 1, 96>}, {pipeline_mode = #tpu.pipeline_mode<synchronous>, transform_indices = @transform_3, window_bounds = array<i64: 32, 32>}, {pipeline_mode = #tpu.pipeline_mode<synchronous>, transform_indices = @transform_4, window_bounds = array<i64: 1, 32>}, {transform_indices = @transform_5, window_bounds = array<i64: 1, 8, 32>}]} {
    %c0_i32 = arith.constant 0 : i32
    %0 = arith.cmpi eq, %arg1, %c0_i32 : i32
    %1 = arith.extui %0 : i1 to i32
    %c0_i32_0 = arith.constant 0 : i32
    %2 = arith.cmpi ne, %1, %c0_i32_0 : i32
    scf.if %2 {
      %c0_58 = arith.constant 0 : index
      %c0_59 = arith.constant 0 : index
      %c0_60 = arith.constant 0 : index
      %148 = vector.load %arg2[%c0_58, %c0_59, %c0_60] : memref<1x8x32xf32, #tpu.memory_space<vmem>>, vector<1x8x32xf32>
      %149 = vector.shape_cast %148 : vector<1x8x32xf32> to vector<8x32xf32>
      %150 = arith.truncf %149 : vector<8x32xf32> to vector<8x32xbf16>
      %c0_61 = arith.constant 0 : index
      %c0_62 = arith.constant 0 : index
      %151 = vector.load %arg3[%c0_61, %c0_62] : memref<32x96xbf16, #tpu.memory_space<vmem>>, vector<32x96xbf16>
      %cst_63 = arith.constant dense<0.000000e+00> : vector<8x96xf32>
      %152 = tpu.matmul %150, %151, %cst_63 {dimension_numbers = #tpu.dot_dimension_numbers<[1], [0], [0], [1], [0, 0, 1, 1], [], []>} : vector<8x32xbf16>, vector<32x96xbf16>, vector<8x96xf32> -> vector<8x96xf32>
      %c0_64 = arith.constant 0 : index
      %c0_65 = arith.constant 0 : index
      %153 = vector.load %arg4[%c0_64, %c0_65] : memref<1x96xf32, #tpu.memory_space<vmem>>, vector<1x96xf32>
      %154 = vector.broadcast %153 : vector<1x96xf32> to vector<8x96xf32>
      %155 = arith.addf %152, %154 : vector<8x96xf32>
      %156 = arith.truncf %155 : vector<8x96xf32> to vector<8x96xbf16>
      %c0_66 = arith.constant 0 : index
      %c0_67 = arith.constant 0 : index
      %157 = vector.load %arg8[%c0_66, %c0_67] : memref<8x96xbf16, #tpu.memory_space<vmem>>, vector<8x96xbf16>
      tpu.vector_store %arg8[%c0_66, %c0_67], %156 {strides = array<i32>} : memref<8x96xbf16, #tpu.memory_space<vmem>>, vector<8x96xbf16>,
    } else {
    }
    %c8_i32 = arith.constant 8 : i32
    %3 = arith.muli %arg1, %c8_i32 : i32
    %4 = tpu.assume_multiple %3, 8 : i32
    %cst = arith.constant 0.000000e+00 : f32
    %5 = vector.broadcast %cst : f32 to vector<8x32xf32>
    %6 = arith.index_cast %4 : i32 to index
    %c0 = arith.constant 0 : index
    %7 = vector.load %arg8[%6, %c0] : memref<8x96xbf16, #tpu.memory_space<vmem>>, vector<8x8xbf16>
    %c0_1 = arith.constant 0 : index
    %c32 = arith.constant 32 : index
    %8 = vector.load %arg8[%c0_1, %c32] : memref<8x96xbf16, #tpu.memory_space<vmem>>, vector<8x8xbf16>
    %c0_2 = arith.constant 0 : index
    %c64 = arith.constant 64 : index
    %9 = vector.load %arg8[%c0_2, %c64] : memref<8x96xbf16, #tpu.memory_space<vmem>>, vector<8x8xbf16>
    %cst_3 = arith.constant 0xFF800000 : f32
    %10 = vector.broadcast %cst_3 : f32 to vector<8x1xf32>
    %cst_4 = arith.constant 0.000000e+00 : f32
    %11 = vector.broadcast %cst_4 : f32 to vector<8x1xf32>
    %cst_5 = arith.constant 0.000000e+00 : f32
    %12 = vector.broadcast %cst_5 : f32 to vector<8x8xf32>
    %cst_6 = arith.constant dense<0.000000e+00> : vector<8x8xf32>
    %13 = tpu.matmul %7, %8, %cst_6 {dimension_numbers = #tpu.dot_dimension_numbers<[1], [1], [0], [0], [0, 0, 1, 0], [], []>} : vector<8x8xbf16>, vector<8x8xbf16>, vector<8x8xf32> -> vector<8x8xf32>
    %cst_7 = arith.constant 0.353553385 : f32
    %14 = vector.broadcast %cst_7 : f32 to vector<8x8xf32>
    %15 = arith.mulf %13, %14 : vector<8x8xf32>
    %cst_8 = arith.constant dense<0xFF800000> : vector<8xf32>
    %16 = vector.multi_reduction <maximumf>, %15, %cst_8 [1] : vector<8x8xf32> to vector<8xf32>
    %17 = vector.shape_cast %16 : vector<8xf32> to vector<8x1xf32>
    %18 = arith.maximumf %10, %17 : vector<8x1xf32>
    %19 = arith.subf %10, %18 : vector<8x1xf32>
    %20 = math.exp %19 : vector<8x1xf32>
    %21 = vector.broadcast %18 : vector<8x1xf32> to vector<8x8xf32>
    %22 = arith.subf %15, %21 : vector<8x8xf32>
    %23 = math.exp %22 : vector<8x8xf32>
    %24 = arith.mulf %20, %11 : vector<8x1xf32>
    %cst_9 = arith.constant dense<0.000000e+00> : vector<8xf32>
    %25 = vector.multi_reduction <add>, %23, %cst_9 [1] : vector<8x8xf32> to vector<8xf32>
    %26 = vector.shape_cast %25 : vector<8xf32> to vector<8x1xf32>
    %27 = arith.addf %24, %26 : vector<8x1xf32>
    %28 = vector.broadcast %20 : vector<8x1xf32> to vector<8x8xf32>
    %29 = arith.mulf %28, %12 : vector<8x8xf32>
    %30 = arith.truncf %23 : vector<8x8xf32> to vector<8x8xbf16>
    %cst_10 = arith.constant dense<0.000000e+00> : vector<8x8xf32>
    %31 = tpu.matmul %30, %9, %cst_10 {dimension_numbers = #tpu.dot_dimension_numbers<[1], [0], [0], [1], [0, 0, 1, 1], [], []>} : vector<8x8xbf16>, vector<8x8xbf16>, vector<8x8xf32> -> vector<8x8xf32>
    %32 = arith.addf %29, %31 : vector<8x8xf32>
    %33 = tpu.reciprocal %27 {approx = true} : vector<8x1xf32> -> vector<8x1xf32>
    %34 = vector.broadcast %33 : vector<8x1xf32> to vector<8x8xf32>
    %35 = arith.mulf %32, %34 : vector<8x8xf32>
    %36 = arith.truncf %35 : vector<8x8xf32> to vector<8x8xbf16>
    %c0_11 = arith.constant 0 : index
    %c0_12 = arith.constant 0 : index
    %37 = vector.load %arg5[%c0_11, %c0_12] : memref<32x32xbf16, #tpu.memory_space<vmem>>, vector<8x32xbf16>
    %cst_13 = arith.constant dense<0.000000e+00> : vector<8x32xf32>
    %38 = tpu.matmul %36, %37, %cst_13 {dimension_numbers = #tpu.dot_dimension_numbers<[1], [0], [0], [1], [0, 0, 1, 1], [], []>} : vector<8x8xbf16>, vector<8x32xbf16>, vector<8x32xf32> -> vector<8x32xf32>
    %39 = arith.addf %5, %38 : vector<8x32xf32>
    %40 = arith.index_cast %4 : i32 to index
    %c8 = arith.constant 8 : index
    %41 = vector.load %arg8[%40, %c8] : memref<8x96xbf16, #tpu.memory_space<vmem>>, vector<8x8xbf16>
    %c0_14 = arith.constant 0 : index
    %c40 = arith.constant 40 : index
    %42 = vector.load %arg8[%c0_14, %c40] : memref<8x96xbf16, #tpu.memory_space<vmem>>, vector<8x8xbf16>
    %c0_15 = arith.constant 0 : index
    %c72 = arith.constant 72 : index
    %43 = vector.load %arg8[%c0_15, %c72] : memref<8x96xbf16, #tpu.memory_space<vmem>>, vector<8x8xbf16>
    %cst_16 = arith.constant 0xFF800000 : f32
    %44 = vector.broadcast %cst_16 : f32 to vector<8x1xf32>
    %cst_17 = arith.constant 0.000000e+00 : f32
    %45 = vector.broadcast %cst_17 : f32 to vector<8x1xf32>
    %cst_18 = arith.constant 0.000000e+00 : f32
    %46 = vector.broadcast %cst_18 : f32 to vector<8x8xf32>
    %cst_19 = arith.constant dense<0.000000e+00> : vector<8x8xf32>
    %47 = tpu.matmul %41, %42, %cst_19 {dimension_numbers = #tpu.dot_dimension_numbers<[1], [1], [0], [0], [0, 0, 1, 0], [], []>} : vector<8x8xbf16>, vector<8x8xbf16>, vector<8x8xf32> -> vector<8x8xf32>
    %cst_20 = arith.constant 0.353553385 : f32
    %48 = vector.broadcast %cst_20 : f32 to vector<8x8xf32>
    %49 = arith.mulf %47, %48 : vector<8x8xf32>
    %cst_21 = arith.constant dense<0xFF800000> : vector<8xf32>
    %50 = vector.multi_reduction <maximumf>, %49, %cst_21 [1] : vector<8x8xf32> to vector<8xf32>
    %51 = vector.shape_cast %50 : vector<8xf32> to vector<8x1xf32>
    %52 = arith.maximumf %44, %51 : vector<8x1xf32>
    %53 = arith.subf %44, %52 : vector<8x1xf32>
    %54 = math.exp %53 : vector<8x1xf32>
    %55 = vector.broadcast %52 : vector<8x1xf32> to vector<8x8xf32>
    %56 = arith.subf %49, %55 : vector<8x8xf32>
    %57 = math.exp %56 : vector<8x8xf32>
    %58 = arith.mulf %54, %45 : vector<8x1xf32>
    %cst_22 = arith.constant dense<0.000000e+00> : vector<8xf32>
    %59 = vector.multi_reduction <add>, %57, %cst_22 [1] : vector<8x8xf32> to vector<8xf32>
    %60 = vector.shape_cast %59 : vector<8xf32> to vector<8x1xf32>
    %61 = arith.addf %58, %60 : vector<8x1xf32>
    %62 = vector.broadcast %54 : vector<8x1xf32> to vector<8x8xf32>
    %63 = arith.mulf %62, %46 : vector<8x8xf32>
    %64 = arith.truncf %57 : vector<8x8xf32> to vector<8x8xbf16>
    %cst_23 = arith.constant dense<0.000000e+00> : vector<8x8xf32>
    %65 = tpu.matmul %64, %43, %cst_23 {dimension_numbers = #tpu.dot_dimension_numbers<[1], [0], [0], [1], [0, 0, 1, 1], [], []>} : vector<8x8xbf16>, vector<8x8xbf16>, vector<8x8xf32> -> vector<8x8xf32>
    %66 = arith.addf %63, %65 : vector<8x8xf32>
    %67 = tpu.reciprocal %61 {approx = true} : vector<8x1xf32> -> vector<8x1xf32>
    %68 = vector.broadcast %67 : vector<8x1xf32> to vector<8x8xf32>
    %69 = arith.mulf %66, %68 : vector<8x8xf32>
    %70 = arith.truncf %69 : vector<8x8xf32> to vector<8x8xbf16>
    %c8_24 = arith.constant 8 : index
    %c0_25 = arith.constant 0 : index
    %71 = vector.load %arg5[%c8_24, %c0_25] : memref<32x32xbf16, #tpu.memory_space<vmem>>, vector<8x32xbf16>
    %cst_26 = arith.constant dense<0.000000e+00> : vector<8x32xf32>
    %72 = tpu.matmul %70, %71, %cst_26 {dimension_numbers = #tpu.dot_dimension_numbers<[1], [0], [0], [1], [0, 0, 1, 1], [], []>} : vector<8x8xbf16>, vector<8x32xbf16>, vector<8x32xf32> -> vector<8x32xf32>
    %73 = arith.addf %39, %72 : vector<8x32xf32>
    %74 = arith.index_cast %4 : i32 to index
    %c16 = arith.constant 16 : index
    %75 = vector.load %arg8[%74, %c16] : memref<8x96xbf16, #tpu.memory_space<vmem>>, vector<8x8xbf16>
    %c0_27 = arith.constant 0 : index
    %c48 = arith.constant 48 : index
    %76 = vector.load %arg8[%c0_27, %c48] : memref<8x96xbf16, #tpu.memory_space<vmem>>, vector<8x8xbf16>
    %c0_28 = arith.constant 0 : index
    %c80 = arith.constant 80 : index
    %77 = vector.load %arg8[%c0_28, %c80] : memref<8x96xbf16, #tpu.memory_space<vmem>>, vector<8x8xbf16>
    %cst_29 = arith.constant 0xFF800000 : f32
    %78 = vector.broadcast %cst_29 : f32 to vector<8x1xf32>
    %cst_30 = arith.constant 0.000000e+00 : f32
    %79 = vector.broadcast %cst_30 : f32 to vector<8x1xf32>
    %cst_31 = arith.constant 0.000000e+00 : f32
    %80 = vector.broadcast %cst_31 : f32 to vector<8x8xf32>
    %cst_32 = arith.constant dense<0.000000e+00> : vector<8x8xf32>
    %81 = tpu.matmul %75, %76, %cst_32 {dimension_numbers = #tpu.dot_dimension_numbers<[1], [1], [0], [0], [0, 0, 1, 0], [], []>} : vector<8x8xbf16>, vector<8x8xbf16>, vector<8x8xf32> -> vector<8x8xf32>
    %cst_33 = arith.constant 0.353553385 : f32
    %82 = vector.broadcast %cst_33 : f32 to vector<8x8xf32>
    %83 = arith.mulf %81, %82 : vector<8x8xf32>
    %cst_34 = arith.constant dense<0xFF800000> : vector<8xf32>
    %84 = vector.multi_reduction <maximumf>, %83, %cst_34 [1] : vector<8x8xf32> to vector<8xf32>
    %85 = vector.shape_cast %84 : vector<8xf32> to vector<8x1xf32>
    %86 = arith.maximumf %78, %85 : vector<8x1xf32>
    %87 = arith.subf %78, %86 : vector<8x1xf32>
    %88 = math.exp %87 : vector<8x1xf32>
    %89 = vector.broadcast %86 : vector<8x1xf32> to vector<8x8xf32>
    %90 = arith.subf %83, %89 : vector<8x8xf32>
    %91 = math.exp %90 : vector<8x8xf32>
    %92 = arith.mulf %88, %79 : vector<8x1xf32>
    %cst_35 = arith.constant dense<0.000000e+00> : vector<8xf32>
    %93 = vector.multi_reduction <add>, %91, %cst_35 [1] : vector<8x8xf32> to vector<8xf32>
    %94 = vector.shape_cast %93 : vector<8xf32> to vector<8x1xf32>
    %95 = arith.addf %92, %94 : vector<8x1xf32>
    %96 = vector.broadcast %88 : vector<8x1xf32> to vector<8x8xf32>
    %97 = arith.mulf %96, %80 : vector<8x8xf32>
    %98 = arith.truncf %91 : vector<8x8xf32> to vector<8x8xbf16>
    %cst_36 = arith.constant dense<0.000000e+00> : vector<8x8xf32>
    %99 = tpu.matmul %98, %77, %cst_36 {dimension_numbers = #tpu.dot_dimension_numbers<[1], [0], [0], [1], [0, 0, 1, 1], [], []>} : vector<8x8xbf16>, vector<8x8xbf16>, vector<8x8xf32> -> vector<8x8xf32>
    %100 = arith.addf %97, %99 : vector<8x8xf32>
    %101 = tpu.reciprocal %95 {approx = true} : vector<8x1xf32> -> vector<8x1xf32>
    %102 = vector.broadcast %101 : vector<8x1xf32> to vector<8x8xf32>
    %103 = arith.mulf %100, %102 : vector<8x8xf32>
    %104 = arith.truncf %103 : vector<8x8xf32> to vector<8x8xbf16>
    %c16_37 = arith.constant 16 : index
    %c0_38 = arith.constant 0 : index
    %105 = vector.load %arg5[%c16_37, %c0_38] : memref<32x32xbf16, #tpu.memory_space<vmem>>, vector<8x32xbf16>
    %cst_39 = arith.constant dense<0.000000e+00> : vector<8x32xf32>
    %106 = tpu.matmul %104, %105, %cst_39 {dimension_numbers = #tpu.dot_dimension_numbers<[1], [0], [0], [1], [0, 0, 1, 1], [], []>} : vector<8x8xbf16>, vector<8x32xbf16>, vector<8x32xf32> -> vector<8x32xf32>
    %107 = arith.addf %73, %106 : vector<8x32xf32>
    %108 = arith.index_cast %4 : i32 to index
    %c24 = arith.constant 24 : index
    %109 = vector.load %arg8[%108, %c24] : memref<8x96xbf16, #tpu.memory_space<vmem>>, vector<8x8xbf16>
    %c0_40 = arith.constant 0 : index
    %c56 = arith.constant 56 : index
    %110 = vector.load %arg8[%c0_40, %c56] : memref<8x96xbf16, #tpu.memory_space<vmem>>, vector<8x8xbf16>
    %c0_41 = arith.constant 0 : index
    %c88 = arith.constant 88 : index
    %111 = vector.load %arg8[%c0_41, %c88] : memref<8x96xbf16, #tpu.memory_space<vmem>>, vector<8x8xbf16>
    %cst_42 = arith.constant 0xFF800000 : f32
    %112 = vector.broadcast %cst_42 : f32 to vector<8x1xf32>
    %cst_43 = arith.constant 0.000000e+00 : f32
    %113 = vector.broadcast %cst_43 : f32 to vector<8x1xf32>
    %cst_44 = arith.constant 0.000000e+00 : f32
    %114 = vector.broadcast %cst_44 : f32 to vector<8x8xf32>
    %cst_45 = arith.constant dense<0.000000e+00> : vector<8x8xf32>
    %115 = tpu.matmul %109, %110, %cst_45 {dimension_numbers = #tpu.dot_dimension_numbers<[1], [1], [0], [0], [0, 0, 1, 0], [], []>} : vector<8x8xbf16>, vector<8x8xbf16>, vector<8x8xf32> -> vector<8x8xf32>
    %cst_46 = arith.constant 0.353553385 : f32
    %116 = vector.broadcast %cst_46 : f32 to vector<8x8xf32>
    %117 = arith.mulf %115, %116 : vector<8x8xf32>
    %cst_47 = arith.constant dense<0xFF800000> : vector<8xf32>
    %118 = vector.multi_reduction <maximumf>, %117, %cst_47 [1] : vector<8x8xf32> to vector<8xf32>
    %119 = vector.shape_cast %118 : vector<8xf32> to vector<8x1xf32>
    %120 = arith.maximumf %112, %119 : vector<8x1xf32>
    %121 = arith.subf %112, %120 : vector<8x1xf32>
    %122 = math.exp %121 : vector<8x1xf32>
    %123 = vector.broadcast %120 : vector<8x1xf32> to vector<8x8xf32>
    %124 = arith.subf %117, %123 : vector<8x8xf32>
    %125 = math.exp %124 : vector<8x8xf32>
    %126 = arith.mulf %122, %113 : vector<8x1xf32>
    %cst_48 = arith.constant dense<0.000000e+00> : vector<8xf32>
    %127 = vector.multi_reduction <add>, %125, %cst_48 [1] : vector<8x8xf32> to vector<8xf32>
    %128 = vector.shape_cast %127 : vector<8xf32> to vector<8x1xf32>
    %129 = arith.addf %126, %128 : vector<8x1xf32>
    %130 = vector.broadcast %122 : vector<8x1xf32> to vector<8x8xf32>
    %131 = arith.mulf %130, %114 : vector<8x8xf32>
    %132 = arith.truncf %125 : vector<8x8xf32> to vector<8x8xbf16>
    %cst_49 = arith.constant dense<0.000000e+00> : vector<8x8xf32>
    %133 = tpu.matmul %132, %111, %cst_49 {dimension_numbers = #tpu.dot_dimension_numbers<[1], [0], [0], [1], [0, 0, 1, 1], [], []>} : vector<8x8xbf16>, vector<8x8xbf16>, vector<8x8xf32> -> vector<8x8xf32>
    %134 = arith.addf %131, %133 : vector<8x8xf32>
    %135 = tpu.reciprocal %129 {approx = true} : vector<8x1xf32> -> vector<8x1xf32>
    %136 = vector.broadcast %135 : vector<8x1xf32> to vector<8x8xf32>
    %137 = arith.mulf %134, %136 : vector<8x8xf32>
    %138 = arith.truncf %137 : vector<8x8xf32> to vector<8x8xbf16>
    %c24_50 = arith.constant 24 : index
    %c0_51 = arith.constant 0 : index
    %139 = vector.load %arg5[%c24_50, %c0_51] : memref<32x32xbf16, #tpu.memory_space<vmem>>, vector<8x32xbf16>
    %cst_52 = arith.constant dense<0.000000e+00> : vector<8x32xf32>
    %140 = tpu.matmul %138, %139, %cst_52 {dimension_numbers = #tpu.dot_dimension_numbers<[1], [0], [0], [1], [0, 0, 1, 1], [], []>} : vector<8x8xbf16>, vector<8x32xbf16>, vector<8x32xf32> -> vector<8x32xf32>
    %141 = arith.addf %107, %140 : vector<8x32xf32>
    %c0_53 = arith.constant 0 : index
    %c0_54 = arith.constant 0 : index
    %142 = vector.load %arg6[%c0_53, %c0_54] : memref<1x32xf32, #tpu.memory_space<vmem>>, vector<1x32xf32>
    %143 = vector.broadcast %142 : vector<1x32xf32> to vector<8x32xf32>
    %144 = arith.addf %141, %143 : vector<8x32xf32>
    %c0_55 = arith.constant 0 : index
    %c0_56 = arith.constant 0 : index
    %c0_57 = arith.constant 0 : index
    %145 = vector.load %arg7[%c0_55, %c0_56, %c0_57] : memref<1x8x32xf32, #tpu.memory_space<vmem>>, vector<1x8x32xf32>
    %146 = vector.shape_cast %145 : vector<1x8x32xf32> to vector<8x32xf32>
    %147 = vector.shape_cast %144 : vector<8x32xf32> to vector<1x8x32xf32>
    tpu.vector_store %arg7[%c0_55, %c0_56, %c0_57], %147 {strides = array<i32>} : memref<1x8x32xf32, #tpu.memory_space<vmem>>, vector<1x8x32xf32>,
    return
  }
  func.func @transform_0(%arg0: i32, %arg1: i32) -> (i32, i32, i32) {
    %c0_i32 = arith.constant 0 : i32
    %c0_i32_0 = arith.constant 0 : i32
    %c0_i32_1 = arith.constant 0 : i32
    return %arg0, %c0_i32, %c0_i32_0 : i32, i32, i32
  }
  func.func @transform_1(%arg0: i32, %arg1: i32) -> (i32, i32) {
    %c0_i32 = arith.constant 0 : i32
    %c0_i32_0 = arith.constant 0 : i32
    %c0_i32_1 = arith.constant 0 : i32
    return %c0_i32, %c0_i32_0 : i32, i32
  }
  func.func @transform_2(%arg0: i32, %arg1: i32) -> (i32, i32) {
    %c0_i32 = arith.constant 0 : i32
    %c0_i32_0 = arith.constant 0 : i32
    %c0_i32_1 = arith.constant 0 : i32
    return %c0_i32, %c0_i32_0 : i32, i32
  }
  func.func @transform_3(%arg0: i32, %arg1: i32) -> (i32, i32) {
    %c0_i32 = arith.constant 0 : i32
    %c0_i32_0 = arith.constant 0 : i32
    %c0_i32_1 = arith.constant 0 : i32
    return %c0_i32, %c0_i32_0 : i32, i32
  }
  func.func @transform_4(%arg0: i32, %arg1: i32) -> (i32, i32) {
    %c0_i32 = arith.constant 0 : i32
    %c0_i32_0 = arith.constant 0 : i32
    %c0_i32_1 = arith.constant 0 : i32
    return %c0_i32, %c0_i32_0 : i32, i32
  }
  func.func @transform_5(%arg0: i32, %arg1: i32) -> (i32, i32, i32) {
    %c0_i32 = arith.constant 0 : i32
    %c0_i32_0 = arith.constant 0 : i32
    return %arg0, %arg1, %c0_i32 : i32, i32, i32
  }
}

</mosaic_0001>

<llo_original>
// kernel: tpu_custom_call.1
$region0: #{tpu_custom_call.1}
  #allocation0 [shape = 'u32[]', space=smem, size = 0x4, offset = 0x4, fixed_abs, tag = 'smem constant byte address 0x4 - core index']
  #allocation1 [shape = 'u32[144,128]{1,0:T(1,128)}', space=vmem, size = 0x12000, scoped, tag = 'internal scratch']
  #allocation2 [shape = 'bf16[8,96]{1,0:T(8,128)(2,1)}', space=vmem, size = 0x800, scoped, tag = 'scratch operand']
  %s0 = inlined_call_operand.hbm [shape: f32[2,8,32], index: 0, kind: input, shape index: {}]
  %s1 = inlined_call_operand.hbm [shape: bf16[32,96], index: 1, kind: input, shape index: {}]
  %s2 = inlined_call_operand.vmem [shape: f32[1,96], index: 2, kind: input, shape index: {}]
  %s3 = inlined_call_operand.hbm [shape: bf16[32,32], index: 3, kind: input, shape index: {}]
  %s4 = inlined_call_operand.vmem [shape: f32[1,32], index: 4, kind: input, shape index: {}]
  %s5 = inlined_call_operand.hbm [shape: f32[2,8,32], index: 5, kind: output, shape index: {}]
  %s6 = sld [smem:[#allocation0]]
  $region69: #{tpu_custom_call.1} parent=0
    _
  %s8 = ssub.s32 1, %s6
  %s9 = scalar_select 0, %s8, %s6
  $region1: #{tpu_custom_call.1} parent=0
    #allocation3 [shape = 'u8[8192]{0}', space=vmem, size = 0x2000, scoped, tag = 'input window, operand 0']
    #allocation4 [shape = 's32[2]{0}', space=sflag, size = 0x8, scoped, tag = 'scoped memory for tpu_custom_call.1']
    #allocation5 [shape = 's32[2]{0}', space=sflag, size = 0x8, scoped, tag = 'scoped memory for tpu_custom_call.1']
    #allocation6 [shape = 'u8[8192]{0}', space=vmem, size = 0x2000, scoped, tag = 'input window, operand 1, single buffered']
    #allocation7 [shape = 's32[1]{0}', space=sflag, size = 0x4, scoped, tag = 'scoped memory for tpu_custom_call.1']
    #allocation8 [shape = 'u8[8192]{0}', space=vmem, size = 0x2000, scoped, tag = 'input window, operand 3, single buffered']
    #allocation9 [shape = 'u8[8192]{0}', space=vmem, size = 0x2000, scoped, tag = 'output window, operand 0']
    %10 = vsyncpa [#allocation4], 0
    %s11 = scalar_lea.sflag [#allocation4], 1
    %12 = vsyncpa %s11, 0
    %13 = vsyncpa [#allocation7], 0
    %14 = vsyncpa [#allocation5], 0
    %s15 = scalar_lea.sflag [#allocation5], 1
    %16 = vsyncpa %s15, 0
    loop: start=0, step=1, limit=4
    $region2: #{tpu_custom_call.1} parent=1 // loop_pre_header
      _
    $region3: #{tpu_custom_call.1} parent=1 // loop_header
      %s18 = sphi 0, %s22
      %p19 = scmp.ge.s32.totalorder %s18, 4
      %s25 = sphi 0, %s37
      %s26 = sphi 0, %s33
      %s27 = sphi 0, %s25
      %s28 = sphi 0, %s26
      %s29 = sphi 0, %s27
      %s30 = sphi 0, %s28
      %s40 = sphi 0, %s42
      %s43 = sphi 0, %s40
      %s44 = sphi 0, %s43
      %s60 = sphi 0, %s44
      %s64 = sphi 0, %s64
      %s66 = sphi 0, %s64
      %s67 = sphi 0, %s66
      %s81 = sphi 0, %s67
      %s85 = sphi 0, %s85
      %s87 = sphi 0, %s85
      %s88 = sphi 0, %s87
      %s102 = sphi 0, %s88
      %s106 = sphi 0, %s106
      %s108 = sphi 0, %s106
      %s109 = sphi 0, %s108
      %s123 = sphi 0, %s109
      %s127 = sphi 0, %s127
      %s129 = sphi 0, %s127
      %s130 = sphi 0, %s129
      %s144 = sphi 0, %s130
      %s152 = sphi 0, %s154
      %s155 = sphi 0, %s152
      %s156 = sphi 0, %s155
      %s172 = sphi 0, %s156
    $region4: #{tpu_custom_call.1} parent=1 // loop_header_branch
      %21 = sbr.rel (%p19) target = $region8
    $region5: #{tpu_custom_call.1} parent=1 // loop_body
      %s23 = ssub.s32 %s18, 1
      %s24 = ssub.s32 %s18, 2
      %s31 = sadd.s32 1, %s26
      %p32 = scmp.ge.s32.totalorder %s31, 1
      %s33 = scalar_select %p32, 0, %s31
      %s34 = sadd.s32 1, %s25
      %s35 = scalar_select %p32, %s34, %s25
      %p36 = scmp.ge.s32.totalorder %s35, 2
      %s37 = scalar_select %p36, 0, %s35
      %s38 = ssub.s32 %s25, %s37
      %p39 = scmp.eq.s32.totalorder %s38, 0
      %s41 = sadd.s32 %s40, 1
      %s42 = scalar_select %p39, %s40, %s41
      %p45 = pneg %p39
      %p46 = scmp.eq.s32.totalorder %s18, 1
      %p47 = por %p45, %p46
      %p48 = scmp.ne.s32.totalorder %s40, %s43
      %p49 = scmp.eq.s32.totalorder %s18, 0
      %p50 = por %p48, %p49
      %p51 = scmp.ne.s32.totalorder %s40, %s43
      %p52 = scmp.eq.s32.totalorder %s23, 1
      %p53 = por %p51, %p52
      %p54 = scmp.ne.s32.totalorder %s43, %s44
      %p55 = scmp.eq.s32.totalorder %s23, 0
      %p56 = por %p54, %p55
      %p57 = scmp.ne.s32.totalorder %s43, %s44
      %p58 = scmp.eq.s32.totalorder %s24, 1
      %p59 = por %p57, %p58
      %p61 = scmp.ne.s32.totalorder %s44, %s60
      %p62 = scmp.eq.s32.totalorder %s24, 0
      %p63 = por %p61, %p62
      %s65 = sadd.s32 %s64, 1
      %p68 = scmp.eq.s32.totalorder %s18, 1
      %p69 = scmp.ne.s32.totalorder %s64, %s66
      %p70 = scmp.eq.s32.totalorder %s18, 0
      %p71 = por %p69, %p70
      %p72 = scmp.ne.s32.totalorder %s64, %s66
      %p73 = scmp.eq.s32.totalorder %s23, 1
      %p74 = por %p72, %p73
      %p75 = scmp.ne.s32.totalorder %s66, %s67
      %p76 = scmp.eq.s32.totalorder %s23, 0
      %p77 = por %p75, %p76
      %p78 = scmp.ne.s32.totalorder %s66, %s67
      %p79 = scmp.eq.s32.totalorder %s24, 1
      %p80 = por %p78, %p79
      %p82 = scmp.ne.s32.totalorder %s67, %s81
      %p83 = scmp.eq.s32.totalorder %s24, 0
      %p84 = por %p82, %p83
      %s86 = sadd.s32 %s85, 1
      %p89 = scmp.eq.s32.totalorder %s18, 1
      %p90 = scmp.ne.s32.totalorder %s85, %s87
      %p91 = scmp.eq.s32.totalorder %s18, 0
      %p92 = por %p90, %p91
      %p93 = scmp.ne.s32.totalorder %s85, %s87
      %p94 = scmp.eq.s32.totalorder %s23, 1
      %p95 = por %p93, %p94
      %p96 = scmp.ne.s32.totalorder %s87, %s88
      %p97 = scmp.eq.s32.totalorder %s23, 0
      %p98 = por %p96, %p97
      %p99 = scmp.ne.s32.totalorder %s87, %s88
      %p100 = scmp.eq.s32.totalorder %s24, 1
      %p101 = por %p99, %p100
      %p103 = scmp.ne.s32.totalorder %s88, %s102
      %p104 = scmp.eq.s32.totalorder %s24, 0
      %p105 = por %p103, %p104
      %s107 = sadd.s32 %s106, 1
      %p110 = scmp.eq.s32.totalorder %s18, 1
      %p111 = scmp.ne.s32.totalorder %s106, %s108
      %p112 = scmp.eq.s32.totalorder %s18, 0
      %p113 = por %p111, %p112
      %p114 = scmp.ne.s32.totalorder %s106, %s108
      %p115 = scmp.eq.s32.totalorder %s23, 1
      %p116 = por %p114, %p115
      %p117 = scmp.ne.s32.totalorder %s108, %s109
      %p118 = scmp.eq.s32.totalorder %s23, 0
      %p119 = por %p117, %p118
      %p120 = scmp.ne.s32.totalorder %s108, %s109
      %p121 = scmp.eq.s32.totalorder %s24, 1
      %p122 = por %p120, %p121
      %p124 = scmp.ne.s32.totalorder %s109, %s123
      %p125 = scmp.eq.s32.totalorder %s24, 0
      %p126 = por %p124, %p125
      %s128 = sadd.s32 %s127, 1
      %p131 = scmp.eq.s32.totalorder %s18, 1
      %p132 = scmp.ne.s32.totalorder %s127, %s129
      %p133 = scmp.eq.s32.totalorder %s18, 0
      %p134 = por %p132, %p133
      %p135 = scmp.ne.s32.totalorder %s127, %s129
      %p136 = scmp.eq.s32.totalorder %s23, 1
      %p137 = por %p135, %p136
      %p138 = scmp.ne.s32.totalorder %s129, %s130
      %p139 = scmp.eq.s32.totalorder %s23, 0
      %p140 = por %p138, %p139
      %p141 = scmp.ne.s32.totalorder %s129, %s130
      %p142 = scmp.eq.s32.totalorder %s24, 1
      %p143 = por %p141, %p142
      %p145 = scmp.ne.s32.totalorder %s130, %s144
      %p146 = scmp.eq.s32.totalorder %s24, 0
      %p147 = por %p145, %p146
      %s148 = ssub.s32 %s25, %s37
      %s149 = ssub.s32 %s26, %s33
      %s150 = sor.u32 %s148, %s149
      %p151 = scmp.eq.s32.totalorder %s150, 0
      %s153 = sadd.s32 %s152, 1
      %s154 = scalar_select %p151, %s152, %s153
      %p157 = pneg %p151
      %p158 = scmp.eq.s32.totalorder %s18, 1
      %p159 = por %p157, %p158
      %p160 = scmp.ne.s32.totalorder %s152, %s155
      %p161 = scmp.eq.s32.totalorder %s18, 0
      %p162 = por %p160, %p161
      %p163 = scmp.ne.s32.totalorder %s152, %s155
      %p164 = scmp.eq.s32.totalorder %s23, 1
      %p165 = por %p163, %p164
      %p166 = scmp.ne.s32.totalorder %s155, %s156
      %p167 = scmp.eq.s32.totalorder %s23, 0
      %p168 = por %p166, %p167
      %p169 = scmp.ne.s32.totalorder %s155, %s156
      %p170 = scmp.eq.s32.totalorder %s24, 1
      %p171 = por %p169, %p170
      %p173 = scmp.ne.s32.totalorder %s156, %s172
      %p174 = scmp.eq.s32.totalorder %s24, 0
      %p175 = por %p173, %p174
      %p176 = scmp.le.s32.totalorder 1, %s18
      %p177 = scmp.lt.s32.totalorder %s18, 3
      %p178 = pnand %p176, %p177
      %p179 = pneg %p178
      // Predicated region
      $region9: #{tpu_custom_call.1} parent=5 // pred_check
        _
      $region10: #{tpu_custom_call.1} parent=5 // pred_check_branch
        %181 = sbr.rel (%p178) target = $region12
      $region11: #{tpu_custom_call.1} parent=5 // pred_region
        %s182 = ssub.s32 %s18, 1
        // Predicated region
        $region13: #{tpu_custom_call.1} parent=11 // pred_check
          %p183 = pneg %p77
        $region14: #{tpu_custom_call.1} parent=11 // pred_check_branch
          %185 = sbr.rel (%p183) target = $region16
        $region15: #{tpu_custom_call.1} parent=11 // pred_region
          %s187 = ssub.s32 256, 256
          %188 = vsyncadd [#allocation7], %s187
          %s189 = sshll.u32 [#allocation6], 4
          %s190 = int_to_ptr.vmem [resolvable:$true] %s189
          %195 = dma.hbm_to_vmem [thread:$0]  %s1, 256, %s190, [#allocation7], 64, 64, 4
        $region16: #{tpu_custom_call.1} parent=11 // pred_fallthru
          _
        // Predicated region
        $region17: #{tpu_custom_call.1} parent=11 // pred_check
          %p196 = pneg %p98
        $region18: #{tpu_custom_call.1} parent=11 // pred_check_branch
          %198 = sbr.rel (%p196) target = $region20
        $region19: #{tpu_custom_call.1} parent=11 // pred_region
          _
        $region20: #{tpu_custom_call.1} parent=11 // pred_fallthru
          _
        // Predicated region
        $region21: #{tpu_custom_call.1} parent=11 // pred_check
          %p199 = pneg %p119
        $region22: #{tpu_custom_call.1} parent=11 // pred_check_branch
          %201 = sbr.rel (%p199) target = $region24
        $region23: #{tpu_custom_call.1} parent=11 // pred_region
          %s203 = ssub.s32 256, 256
          %204 = vsyncadd [#allocation7], %s203
          %s205 = sshll.u32 [#allocation8], 4
          %s206 = int_to_ptr.vmem [resolvable:$true] %s205
          %211 = dma.hbm_to_vmem [thread:$0]  %s3, 256, %s206, [#allocation7], 64, 64, 4
        $region24: #{tpu_custom_call.1} parent=11 // pred_fallthru
          _
        // Predicated region
        $region25: #{tpu_custom_call.1} parent=11 // pred_check
          %p212 = pneg %p140
        $region26: #{tpu_custom_call.1} parent=11 // pred_check_branch
          %214 = sbr.rel (%p212) target = $region28
        $region27: #{tpu_custom_call.1} parent=11 // pred_region
          _
        $region28: #{tpu_custom_call.1} parent=11 // pred_fallthru
          _
      $region12: #{tpu_custom_call.1} parent=5 // pred_fallthru
        _
      %p215 = scmp.lt.s32.totalorder %s18, 2
      // Predicated region
      $region29: #{tpu_custom_call.1} parent=5 // pred_check
        %p216 = pneg %p215
      $region30: #{tpu_custom_call.1} parent=5 // pred_check_branch
        %218 = sbr.rel (%p216) target = $region32
      $region31: #{tpu_custom_call.1} parent=5 // pred_region
        // Predicated region
        $region33: #{tpu_custom_call.1} parent=31 // pred_check
          %p219 = pneg %p50
        $region34: #{tpu_custom_call.1} parent=31 // pred_check_branch
          %221 = sbr.rel (%p219) target = $region36
        $region35: #{tpu_custom_call.1} parent=31 // pred_region
          %s222 = sand.u32 %s40, 1
          %s223 = scalar_lea.sflag [#allocation4], %s222
          %s224 = sand.u32 %s40, 1
          %s225 = smul.addr %s224, 8
          %s226 = scalar_lea.vmem [#allocation3], %s225
          %s228 = ssub.s32 128, 128
          %229 = vsyncadd %s223, %s228
          %s230 = smul.addr %s25, 128
          %s231 = scalar_lea.hbm %s0, %s230
          %s233 = sshll.u32 %s226, 4
          %s234 = int_to_ptr.vmem [resolvable:$true] %s233
          %236 = dma.hbm_to_vmem [thread:$0]  %s231, 128, %s234, %s223
        $region36: #{tpu_custom_call.1} parent=31 // pred_fallthru
          _
      $region32: #{tpu_custom_call.1} parent=5 // pred_fallthru
        _
      %p237 = scmp.le.s32.totalorder 1, %s18
      %p238 = scmp.lt.s32.totalorder %s18, 3
      %p239 = pnand %p237, %p238
      %p240 = pneg %p239
      // Predicated region
      $region37: #{tpu_custom_call.1} parent=5 // pred_check
        _
      $region38: #{tpu_custom_call.1} parent=5 // pred_check_branch
        %242 = sbr.rel (%p239) target = $region40
      $region39: #{tpu_custom_call.1} parent=5 // pred_region
        %s243 = ssub.s32 %s18, 1
        %s244 = sand.u32 %s43, 1
        %s245 = scalar_lea.sflag [#allocation4], %s244
        %s246 = sand.u32 %s43, 1
        %s247 = smul.addr %s246, 8
        %s248 = scalar_lea.vmem [#allocation3], %s247
        // Predicated region
        $region41: #{tpu_custom_call.1} parent=39 // pred_check
          %p249 = pneg %p56
        $region42: #{tpu_custom_call.1} parent=39 // pred_check_branch
          %251 = sbr.rel (%p249) target = $region44
        $region43: #{tpu_custom_call.1} parent=39 // pred_region
          %252 = dma.done %s245, 128
        $region44: #{tpu_custom_call.1} parent=39 // pred_fallthru
          _
        // Predicated region
        $region45: #{tpu_custom_call.1} parent=39 // pred_check
          %p253 = pneg %p77
        $region46: #{tpu_custom_call.1} parent=39 // pred_check_branch
          %255 = sbr.rel (%p253) target = $region48
        $region47: #{tpu_custom_call.1} parent=39 // pred_region
          %256 = dma.done [#allocation7], 256
        $region48: #{tpu_custom_call.1} parent=39 // pred_fallthru
          _
        // Predicated region
        $region49: #{tpu_custom_call.1} parent=39 // pred_check
          %p257 = pneg %p119
        $region50: #{tpu_custom_call.1} parent=39 // pred_check_branch
          %259 = sbr.rel (%p257) target = $region52
        $region51: #{tpu_custom_call.1} parent=39 // pred_region
          %260 = dma.done [#allocation7], 256
        $region52: #{tpu_custom_call.1} parent=39 // pred_fallthru
          _
        %s261 = sand.u32 %s43, 1
        %s262 = scalar_lea.sflag [#allocation4], %s261
        %s263 = sand.u32 %s43, 1
        %s264 = smul.addr %s263, 8
        %s265 = scalar_lea.vmem [#allocation3], %s264
        %p266 = pneg %p56
        %p267 = pneg %p53
        %p268 = pneg %p77
        %p269 = pneg %p74
        %p270 = pneg %p98
        %p271 = pneg %p95
        %p272 = pneg %p119
        %p273 = pneg %p116
        %p274 = pneg %p140
        %p275 = pneg %p137
        %p276 = pneg %p168
        %p277 = pneg %p165
        %s278 = sand.u32 %s155, 1
        %s279 = scalar_lea.sflag [#allocation5], %s278
        %s280 = sand.u32 %s155, 1
        %s281 = smul.addr %s280, 8
        %s282 = scalar_lea.vmem [#allocation9], %s281
        %p284 = scmp.eq.s32.totalorder %s28, 0
        // Predicated region
        $region53: #{tpu_custom_call.1} parent=39 // pred_check
          %p285 = pneg %p284
        $region54: #{tpu_custom_call.1} parent=39 // pred_check_branch
          %287 = sbr.rel (%p285) target = $region56
        $region55: #{tpu_custom_call.1} parent=39 // pred_region
          %v288 = vld [vmem:[%s248] sm:$0xff]
          %v289 = vpack.c.bf16 %v288, %v288
          %v290 = vld [vmem:[#allocation6] sm:$0xf]
          %v291 = vld [vmem:[#allocation6 + $0x4] sm:$0xf]
          %v292 = vld [vmem:[#allocation6 + $0x8] sm:$0xf]
          %v293 = vld [vmem:[#allocation6 + $0xc] sm:$0xf]
          %v294 = vld [vmem:[%s2] sm:$0x1]
          %v296 = vlaneseq
          %v297 = vshrl.u32 %v296, 7
          %v298 = vsub.s32 0, %v297
          %v299 = vrot.slane %v294, %v298
          %v305 = vunpack.c.l.b16 %v290
          %v306 = vunpack.c.l.b16 %v291
          %v307 = vunpack.c.l.b16 %v292
          %v308 = vunpack.c.l.b16 %v293
          %v309 = vpack.c.b16 %v306, %v305
          %v310 = vpack.c.b16 %v308, %v307
          %vm313 = vcmask 261120
          %v315 = vsel %vm313, %v289, 0
          %317 = vmatprep.subr.bf16.mxu0 0
          %318 = vmatpush1.bf16.msra.mxu0 0
          %319 = vmatprep.subr.bf16.mxu0 0
          %320 = vmatpush1.bf16.msra.mxu0 0
          %321 = vmatprep.subr.bf16.mxu0 0
          %322 = vmatpush1.bf16.msra.mxu0 0
          %323 = vmatprep.subr.bf16.mxu0 0
          %324 = vmatpush1.bf16.msra.mxu0 0
          %325 = vmatprep.subr.bf16.mxu0 0
          %326 = vmatpush1.bf16.msra.mxu0 0
          %327 = vmatprep.subr.bf16.mxu0 0
          %328 = vmatpush1.bf16.msra.mxu0 0
          %329 = vmatprep.subr.bf16.mxu0 0
          %330 = vmatpush1.bf16.msra.mxu0 %v310
          %331 = vmatprep.subr.bf16.mxu0 0
          %332 = vmatpush1.bf16.msra.mxu0 %v309
          %333 = vmatprep.subr.bf16.mxu0 0
          %334 = vmatpush2.bf16.msra.mxu0 0
          %335 = vmatprep.subr.bf16.mxu0 0
          %336 = vmatpush2.bf16.msra.mxu0 0
          %337 = vmatprep.subr.bf16.mxu0 0
          %338 = vmatpush2.bf16.msra.mxu0 0
          %339 = vmatprep.subr.bf16.mxu0 0
          %340 = vmatpush2.bf16.msra.mxu0 0
          %341 = vmatprep.subr.bf16.mxu0 0
          %342 = vmatpush2.bf16.msra.mxu0 0
          %343 = vmatprep.subr.bf16.mxu0 0
          %344 = vmatpush2.bf16.msra.mxu0 0
          %345 = vmatprep.subr.bf16.mxu0 0
          %346 = vmatpush2.bf16.msra.mxu0 0
          %347 = vmatprep.subr.bf16.mxu0 0
          %348 = vmatpush2.bf16.msra.mxu0 0
          %349 = vmatprep.mubr.bf16.mxu0 0
          %350 = vmatmul.mubr.bf16.gmra.mxu0 %v315
          %v351 = vpop.f32.mrf.mxu0
          %v352 = vadd.f32 %v299, %v351
          %v353 = vpop.f32.mrf.mxu0
          %v354 = vpop.f32.mrf.mxu0
          %v355 = vpop.f32.mrf.mxu0
          %356 = vdwg.mxu0
          %v357 = vpack.c.bf16 %v352, %v352
          %vm358 = vcmask 781312
          %359 = vst.msk [vmem:[#allocation2] sm:$0xf] %vm358, %v357
        $region56: #{tpu_custom_call.1} parent=39 // pred_fallthru
          _
        %s360 = smul.u32 %s28, 8
        %s361 = sshra.s32 %s360, 3
        %s362 = sand.u32 %s360, 7
        %s363 = smul.addr %s361, 4
        %s364 = scalar_lea.vmem [#allocation2], %s363
        %v365 = vld [vmem:[%s364] sm:$0xf]
        %v366 = vld [vmem:[#allocation2] sm:$0xf]
        %v368 = vunpack.c.l.b16 %v366
        %v369 = vpack.c.b16 %v368, %v368
        %370 = vrot.lane.b32.xlu0 %v369, 96
        %v371 = vpop.permute.xlu0 %370
        %vm372 = vcmask 64512
        %v374 = vsel %vm372, %v365, 0
        %v377 = vsel %vm372, %v371, 0
        %379 = vmatprep.subr.bf16.mxu0 0
        %380 = vmatpush1.bf16.xpose.msra.mxu0 0
        %381 = vmatprep.subr.bf16.mxu0 0
        %382 = vmatpush1.bf16.xpose.msra.mxu0 0
        %383 = vmatprep.subr.bf16.mxu0 0
        %384 = vmatpush1.bf16.xpose.msra.mxu0 0
        %385 = vmatprep.subr.bf16.mxu0 0
        %386 = vmatpush1.bf16.xpose.msra.mxu0 0
        %387 = vmatprep.subr.bf16.mxu0 0
        %388 = vmatpush1.bf16.xpose.msra.mxu0 0
        %389 = vmatprep.subr.bf16.mxu0 0
        %390 = vmatpush1.bf16.xpose.msra.mxu0 0
        %391 = vmatprep.subr.bf16.mxu0 0
        %392 = vmatpush1.bf16.xpose.msra.mxu0 0
        %393 = vmatprep.subr.bf16.mxu0 0
        %394 = vmatpush1.bf16.xpose.msra.mxu0 %v377
        %395 = vmatprep.subr.bf16.mxu0 0
        %396 = vmatpush2.bf16.xpose.msra.mxu0 0
        %397 = vmatprep.subr.bf16.mxu0 0
        %398 = vmatpush2.bf16.xpose.msra.mxu0 0
        %399 = vmatprep.subr.bf16.mxu0 0
        %400 = vmatpush2.bf16.xpose.msra.mxu0 0
        %401 = vmatprep.subr.bf16.mxu0 0
        %402 = vmatpush2.bf16.xpose.msra.mxu0 0
        %403 = vmatprep.subr.bf16.mxu0 0
        %404 = vmatpush2.bf16.xpose.msra.mxu0 0
        %405 = vmatprep.subr.bf16.mxu0 0
        %406 = vmatpush2.bf16.xpose.msra.mxu0 0
        %407 = vmatprep.subr.bf16.mxu0 0
        %408 = vmatpush2.bf16.xpose.msra.mxu0 0
        %409 = vmatprep.subr.bf16.mxu0 0
        %410 = vmatpush2.bf16.xpose.msra.mxu0 0
        %411 = vmatprep.mubr.bf16.mxu0 0
        %412 = vmatmul.mubr.bf16.gmra.mxu0 %v374
        %v413 = vpop.f32.mrf.mxu0
        %v414 = vadd.f32 0.0, %v413
        %v415 = vpop.f32.mrf.mxu0
        %v416 = vpop.f32.mrf.mxu0
        %v417 = vpop.f32.mrf.mxu0
        %418 = vdwg.mxu0
        %v419 = vmul.f32 %v414, 0.35355338
        %v420 = vsel %vm372, %v419, -inf
        %421 = vmax.xlane.f32.xlu0 %v420
        %v422 = vpop.xlane.xlu0 %421
        %v423 = vsub.f32 -inf, %v422
        %v424 = vmul.f32 %v423, 1.442695
        %v425 = vpow.pop %v424
        %v426 = vsub.f32 %v419, %v422
        %v427 = vmul.f32 %v426, 1.442695
        %v428 = vpow.pop %v427
        %v429 = vmul.f32 %v425, 0.0
        %v430 = vsel %vm372, %v428, 0.0
        %431 = vadd.xlane.f32.xlu0 %v430
        %v432 = vpop.xlane.xlu0 %431
        %v433 = vadd.f32 %v429, %v432
        %v434 = vpack.c.bf16 %v428, %v428
        %435 = vrot.lane.b32.xlu0 %v369, 64
        %v436 = vpop.permute.xlu0 %435
        %v438 = vsel %vm372, %v434, 0
        %vm440 = vcmask 1043456
        %v442 = vsel %vm440, %v436, 0
        %444 = vmatprep.subr.bf16.mxu0 0
        %445 = vmatpush1.bf16.msra.mxu0 0
        %446 = vmatprep.subr.bf16.mxu0 0
        %447 = vmatpush1.bf16.msra.mxu0 0
        %448 = vmatprep.subr.bf16.mxu0 0
        %449 = vmatpush1.bf16.msra.mxu0 0
        %450 = vmatprep.subr.bf16.mxu0 0
        %451 = vmatpush1.bf16.msra.mxu0 0
        %452 = vmatprep.subr.bf16.mxu0 0
        %453 = vmatpush1.bf16.msra.mxu0 0
        %454 = vmatprep.subr.bf16.mxu0 0
        %455 = vmatpush1.bf16.msra.mxu0 0
        %456 = vmatprep.subr.bf16.mxu0 0
        %457 = vmatpush1.bf16.msra.mxu0 0
        %458 = vmatprep.subr.bf16.mxu0 0
        %459 = vmatpush1.bf16.msra.mxu0 %v442
        %460 = vmatprep.subr.bf16.mxu0 0
        %461 = vmatpush2.bf16.msra.mxu0 0
        %462 = vmatprep.subr.bf16.mxu0 0
        %463 = vmatpush2.bf16.msra.mxu0 0
        %464 = vmatprep.subr.bf16.mxu0 0
        %465 = vmatpush2.bf16.msra.mxu0 0
        %466 = vmatprep.subr.bf16.mxu0 0
        %467 = vmatpush2.bf16.msra.mxu0 0
        %468 = vmatprep.subr.bf16.mxu0 0
        %469 = vmatpush2.bf16.msra.mxu0 0
        %470 = vmatprep.subr.bf16.mxu0 0
        %471 = vmatpush2.bf16.msra.mxu0 0
        %472 = vmatprep.subr.bf16.mxu0 0
        %473 = vmatpush2.bf16.msra.mxu0 0
        %474 = vmatprep.subr.bf16.mxu0 0
        %475 = vmatpush2.bf16.msra.mxu0 0
        %476 = vmatprep.mubr.bf16.mxu0 0
        %477 = vmatmul.mubr.bf16.gmra.mxu0 %v438
        %v478 = vpop.f32.mrf.mxu0
        %v479 = vadd.f32 0.0, %v478
        %v480 = vpop.f32.mrf.mxu0
        %v481 = vpop.f32.mrf.mxu0
        %v482 = vpop.f32.mrf.mxu0
        %483 = vdwg.mxu0
        %v484 = vadd.f32 %v429, %v479
        %v485 = vrcp.pop %v433
        %v486 = vmul.f32 %v484, %v485
        %v487 = vpack.c.bf16 %v486, %v486
        %v488 = vld [vmem:[#allocation8] sm:$0xf]
        %v490 = vunpack.c.l.b16 %v365
        %v491 = vpack.c.b16 %v490, %v490
        %492 = vrot.lane.b32.xlu0 %v491, 120
        %v493 = vpop.permute.xlu0 %492
        %494 = vrot.lane.b32.xlu0 %v369, 88
        %v495 = vpop.permute.xlu0 %494
        %v497 = vsel %vm372, %v493, 0
        %v500 = vsel %vm372, %v495, 0
        %502 = vmatprep.subr.bf16.mxu0 0
        %503 = vmatpush1.bf16.xpose.msra.mxu0 0
        %504 = vmatprep.subr.bf16.mxu0 0
        %505 = vmatpush1.bf16.xpose.msra.mxu0 0
        %506 = vmatprep.subr.bf16.mxu0 0
        %507 = vmatpush1.bf16.xpose.msra.mxu0 0
        %508 = vmatprep.subr.bf16.mxu0 0
        %509 = vmatpush1.bf16.xpose.msra.mxu0 0
        %510 = vmatprep.subr.bf16.mxu0 0
        %511 = vmatpush1.bf16.xpose.msra.mxu0 0
        %512 = vmatprep.subr.bf16.mxu0 0
        %513 = vmatpush1.bf16.xpose.msra.mxu0 0
        %514 = vmatprep.subr.bf16.mxu0 0
        %515 = vmatpush1.bf16.xpose.msra.mxu0 0
        %516 = vmatprep.subr.bf16.mxu0 0
        %517 = vmatpush1.bf16.xpose.msra.mxu0 %v500
        %518 = vmatprep.subr.bf16.mxu0 0
        %519 = vmatpush2.bf16.xpose.msra.mxu0 0
        %520 = vmatprep.subr.bf16.mxu0 0
        %521 = vmatpush2.bf16.xpose.msra.mxu0 0
        %522 = vmatprep.subr.bf16.mxu0 0
        %523 = vmatpush2.bf16.xpose.msra.mxu0 0
        %524 = vmatprep.subr.bf16.mxu0 0
        %525 = vmatpush2.bf16.xpose.msra.mxu0 0
        %526 = vmatprep.subr.bf16.mxu0 0
        %527 = vmatpush2.bf16.xpose.msra.mxu0 0
        %528 = vmatprep.subr.bf16.mxu0 0
        %529 = vmatpush2.bf16.xpose.msra.mxu0 0
        %530 = vmatprep.subr.bf16.mxu0 0
        %531 = vmatpush2.bf16.xpose.msra.mxu0 0
        %532 = vmatprep.subr.bf16.mxu0 0
        %533 = vmatpush2.bf16.xpose.msra.mxu0 0
        %534 = vmatprep.mubr.bf16.mxu0 0
        %535 = vmatmul.mubr.bf16.gmra.mxu0 %v497
        %v536 = vpop.f32.mrf.mxu0
        %v537 = vadd.f32 0.0, %v536
        %v538 = vpop.f32.mrf.mxu0
        %v539 = vpop.f32.mrf.mxu0
        %v540 = vpop.f32.mrf.mxu0
        %541 = vdwg.mxu0
        %v542 = vmul.f32 %v537, 0.35355338
        %v543 = vsel %vm372, %v542, -inf
        %544 = vmax.xlane.f32.xlu0 %v543
        %v545 = vpop.xlane.xlu0 %544
        %v546 = vsub.f32 -inf, %v545
        %v547 = vmul.f32 %v546, 1.442695
        %v548 = vpow.pop %v547
        %v549 = vsub.f32 %v542, %v545
        %v550 = vmul.f32 %v549, 1.442695
        %v551 = vpow.pop %v550
        %v552 = vmul.f32 %v548, 0.0
        %v553 = vsel %vm372, %v551, 0.0
        %554 = vadd.xlane.f32.xlu0 %v553
        %v555 = vpop.xlane.xlu0 %554
        %v556 = vadd.f32 %v552, %v555
        %v557 = vpack.c.bf16 %v551, %v551
        %558 = vrot.lane.b32.xlu0 %v369, 56
        %v559 = vpop.permute.xlu0 %558
        %v561 = vsel %vm372, %v557, 0
        %v564 = vsel %vm440, %v559, 0
        %566 = vmatprep.subr.bf16.mxu0 0
        %567 = vmatpush1.bf16.msra.mxu0 0
        %568 = vmatprep.subr.bf16.mxu0 0
        %569 = vmatpush1.bf16.msra.mxu0 0
        %570 = vmatprep.subr.bf16.mxu0 0
        %571 = vmatpush1.bf16.msra.mxu0 0
        %572 = vmatprep.subr.bf16.mxu0 0
        %573 = vmatpush1.bf16.msra.mxu0 0
        %574 = vmatprep.subr.bf16.mxu0 0
        %575 = vmatpush1.bf16.msra.mxu0 0
        %576 = vmatprep.subr.bf16.mxu0 0
        %577 = vmatpush1.bf16.msra.mxu0 0
        %578 = vmatprep.subr.bf16.mxu0 0
        %579 = vmatpush1.bf16.msra.mxu0 0
        %580 = vmatprep.subr.bf16.mxu0 0
        %581 = vmatpush1.bf16.msra.mxu0 %v564
        %582 = vmatprep.subr.bf16.mxu0 0
        %583 = vmatpush2.bf16.msra.mxu0 0
        %584 = vmatprep.subr.bf16.mxu0 0
        %585 = vmatpush2.bf16.msra.mxu0 0
        %586 = vmatprep.subr.bf16.mxu0 0
        %587 = vmatpush2.bf16.msra.mxu0 0
        %588 = vmatprep.subr.bf16.mxu0 0
        %589 = vmatpush2.bf16.msra.mxu0 0
        %590 = vmatprep.subr.bf16.mxu0 0
        %591 = vmatpush2.bf16.msra.mxu0 0
        %592 = vmatprep.subr.bf16.mxu0 0
        %593 = vmatpush2.bf16.msra.mxu0 0
        %594 = vmatprep.subr.bf16.mxu0 0
        %595 = vmatpush2.bf16.msra.mxu0 0
        %596 = vmatprep.subr.bf16.mxu0 0
        %597 = vmatpush2.bf16.msra.mxu0 0
        %598 = vmatprep.mubr.bf16.mxu0 0
        %599 = vmatmul.mubr.bf16.gmra.mxu0 %v561
        %v600 = vpop.f32.mrf.mxu0
        %v601 = vadd.f32 0.0, %v600
        %v602 = vpop.f32.mrf.mxu0
        %v603 = vpop.f32.mrf.mxu0
        %v604 = vpop.f32.mrf.mxu0
        %605 = vdwg.mxu0
        %v606 = vadd.f32 %v552, %v601
        %v607 = vrcp.pop %v556
        %v608 = vmul.f32 %v606, %v607
        %v609 = vpack.c.bf16 %v608, %v608
        %v610 = vld [vmem:[#allocation8 + $0x4] sm:$0xf]
        %v612 = vsel %vm372, %v609, 0
        %v615 = vsel %vm440, %v610, 0
        %617 = vmatprep.subr.bf16.mxu0 0
        %618 = vmatpush1.bf16.msra.mxu0 0
        %619 = vmatprep.subr.bf16.mxu0 0
        %620 = vmatpush1.bf16.msra.mxu0 0
        %621 = vmatprep.subr.bf16.mxu0 0
        %622 = vmatpush1.bf16.msra.mxu0 0
        %623 = vmatprep.subr.bf16.mxu0 0
        %624 = vmatpush1.bf16.msra.mxu0 0
        %625 = vmatprep.subr.bf16.mxu0 0
        %626 = vmatpush1.bf16.msra.mxu0 0
        %627 = vmatprep.subr.bf16.mxu0 0
        %628 = vmatpush1.bf16.msra.mxu0 0
        %629 = vmatprep.subr.bf16.mxu0 0
        %630 = vmatpush1.bf16.msra.mxu0 0
        %631 = vmatprep.subr.bf16.mxu0 0
        %632 = vmatpush1.bf16.msra.mxu0 %v615
        %633 = vmatprep.subr.bf16.mxu0 0
        %634 = vmatpush2.bf16.msra.mxu0 0
        %635 = vmatprep.subr.bf16.mxu0 0
        %636 = vmatpush2.bf16.msra.mxu0 0
        %637 = vmatprep.subr.bf16.mxu0 0
        %638 = vmatpush2.bf16.msra.mxu0 0
        %639 = vmatprep.subr.bf16.mxu0 0
        %640 = vmatpush2.bf16.msra.mxu0 0
        %641 = vmatprep.subr.bf16.mxu0 0
        %642 = vmatpush2.bf16.msra.mxu0 0
        %643 = vmatprep.subr.bf16.mxu0 0
        %644 = vmatpush2.bf16.msra.mxu0 0
        %645 = vmatprep.subr.bf16.mxu0 0
        %646 = vmatpush2.bf16.msra.mxu0 0
        %647 = vmatprep.subr.bf16.mxu0 0
        %648 = vmatpush2.bf16.msra.mxu0 0
        %649 = vmatprep.mubr.bf16.mxu0 0
        %650 = vmatmul.mubr.bf16.gmra.mxu0 %v612
        %v651 = vpop.f32.mrf.mxu0
        %v652 = vadd.f32 0.0, %v651
        %v653 = vpop.f32.mrf.mxu0
        %v654 = vpop.f32.mrf.mxu0
        %v655 = vpop.f32.mrf.mxu0
        %656 = vdwg.mxu0
        %v658 = vsel %vm372, %v487, 0
        %v661 = vsel %vm440, %v488, 0
        %663 = vmatprep.subr.bf16.mxu0 0
        %664 = vmatpush1.bf16.msra.mxu0 0
        %665 = vmatprep.subr.bf16.mxu0 0
        %666 = vmatpush1.bf16.msra.mxu0 0
        %667 = vmatprep.subr.bf16.mxu0 0
        %668 = vmatpush1.bf16.msra.mxu0 0
        %669 = vmatprep.subr.bf16.mxu0 0
        %670 = vmatpush1.bf16.msra.mxu0 0
        %671 = vmatprep.subr.bf16.mxu0 0
        %672 = vmatpush1.bf16.msra.mxu0 0
        %673 = vmatprep.subr.bf16.mxu0 0
        %674 = vmatpush1.bf16.msra.mxu0 0
        %675 = vmatprep.subr.bf16.mxu0 0
        %676 = vmatpush1.bf16.msra.mxu0 0
        %677 = vmatprep.subr.bf16.mxu0 0
        %678 = vmatpush1.bf16.msra.mxu0 %v661
        %679 = vmatprep.subr.bf16.mxu0 0
        %680 = vmatpush2.bf16.msra.mxu0 0
        %681 = vmatprep.subr.bf16.mxu0 0
        %682 = vmatpush2.bf16.msra.mxu0 0
        %683 = vmatprep.subr.bf16.mxu0 0
        %684 = vmatpush2.bf16.msra.mxu0 0
        %685 = vmatprep.subr.bf16.mxu0 0
        %686 = vmatpush2.bf16.msra.mxu0 0
        %687 = vmatprep.subr.bf16.mxu0 0
        %688 = vmatpush2.bf16.msra.mxu0 0
        %689 = vmatprep.subr.bf16.mxu0 0
        %690 = vmatpush2.bf16.msra.mxu0 0
        %691 = vmatprep.subr.bf16.mxu0 0
        %692 = vmatpush2.bf16.msra.mxu0 0
        %693 = vmatprep.subr.bf16.mxu0 0
        %694 = vmatpush2.bf16.msra.mxu0 0
        %695 = vmatprep.mubr.bf16.mxu0 0
        %696 = vmatmul.mubr.bf16.gmra.mxu0 %v658
        %v697 = vpop.f32.mrf.mxu0
        %v698 = vadd.f32 %v652, %v697
        %v699 = vpop.f32.mrf.mxu0
        %v700 = vpop.f32.mrf.mxu0
        %v701 = vpop.f32.mrf.mxu0
        %702 = vdwg.mxu0
        %703 = vrot.lane.b32.xlu0 %v491, 112
        %v704 = vpop.permute.xlu0 %703
        %705 = vrot.lane.b32.xlu0 %v369, 80
        %v706 = vpop.permute.xlu0 %705
        %v708 = vsel %vm372, %v704, 0
        %v711 = vsel %vm372, %v706, 0
        %713 = vmatprep.subr.bf16.mxu0 0
        %714 = vmatpush1.bf16.xpose.msra.mxu0 0
        %715 = vmatprep.subr.bf16.mxu0 0
        %716 = vmatpush1.bf16.xpose.msra.mxu0 0
        %717 = vmatprep.subr.bf16.mxu0 0
        %718 = vmatpush1.bf16.xpose.msra.mxu0 0
        %719 = vmatprep.subr.bf16.mxu0 0
        %720 = vmatpush1.bf16.xpose.msra.mxu0 0
        %721 = vmatprep.subr.bf16.mxu0 0
        %722 = vmatpush1.bf16.xpose.msra.mxu0 0
        %723 = vmatprep.subr.bf16.mxu0 0
        %724 = vmatpush1.bf16.xpose.msra.mxu0 0
        %725 = vmatprep.subr.bf16.mxu0 0
        %726 = vmatpush1.bf16.xpose.msra.mxu0 0
        %727 = vmatprep.subr.bf16.mxu0 0
        %728 = vmatpush1.bf16.xpose.msra.mxu0 %v711
        %729 = vmatprep.subr.bf16.mxu0 0
        %730 = vmatpush2.bf16.xpose.msra.mxu0 0
        %731 = vmatprep.subr.bf16.mxu0 0
        %732 = vmatpush2.bf16.xpose.msra.mxu0 0
        %733 = vmatprep.subr.bf16.mxu0 0
        %734 = vmatpush2.bf16.xpose.msra.mxu0 0
        %735 = vmatprep.subr.bf16.mxu0 0
        %736 = vmatpush2.bf16.xpose.msra.mxu0 0
        %737 = vmatprep.subr.bf16.mxu0 0
        %738 = vmatpush2.bf16.xpose.msra.mxu0 0
        %739 = vmatprep.subr.bf16.mxu0 0
        %740 = vmatpush2.bf16.xpose.msra.mxu0 0
        %741 = vmatprep.subr.bf16.mxu0 0
        %742 = vmatpush2.bf16.xpose.msra.mxu0 0
        %743 = vmatprep.subr.bf16.mxu0 0
        %744 = vmatpush2.bf16.xpose.msra.mxu0 0
        %745 = vmatprep.mubr.bf16.mxu0 0
        %746 = vmatmul.mubr.bf16.gmra.mxu0 %v708
        %v747 = vpop.f32.mrf.mxu0
        %v748 = vadd.f32 0.0, %v747
        %v749 = vpop.f32.mrf.mxu0
        %v750 = vpop.f32.mrf.mxu0
        %v751 = vpop.f32.mrf.mxu0
        %752 = vdwg.mxu0
        %v753 = vmul.f32 %v748, 0.35355338
        %v754 = vsel %vm372, %v753, -inf
        %755 = vmax.xlane.f32.xlu0 %v754
        %v756 = vpop.xlane.xlu0 %755
        %v757 = vsub.f32 -inf, %v756
        %v758 = vmul.f32 %v757, 1.442695
        %v759 = vpow.pop %v758
        %v760 = vsub.f32 %v753, %v756
        %v761 = vmul.f32 %v760, 1.442695
        %v762 = vpow.pop %v761
        %v763 = vmul.f32 %v759, 0.0
        %v764 = vsel %vm372, %v762, 0.0
        %765 = vadd.xlane.f32.xlu0 %v764
        %v766 = vpop.xlane.xlu0 %765
        %v767 = vadd.f32 %v763, %v766
        %v768 = vpack.c.bf16 %v762, %v762
        %769 = vrot.lane.b32.xlu0 %v369, 48
        %v770 = vpop.permute.xlu0 %769
        %v772 = vsel %vm372, %v768, 0
        %v775 = vsel %vm440, %v770, 0
        %777 = vmatprep.subr.bf16.mxu0 0
        %778 = vmatpush1.bf16.msra.mxu0 0
        %779 = vmatprep.subr.bf16.mxu0 0
        %780 = vmatpush1.bf16.msra.mxu0 0
        %781 = vmatprep.subr.bf16.mxu0 0
        %782 = vmatpush1.bf16.msra.mxu0 0
        %783 = vmatprep.subr.bf16.mxu0 0
        %784 = vmatpush1.bf16.msra.mxu0 0
        %785 = vmatprep.subr.bf16.mxu0 0
        %786 = vmatpush1.bf16.msra.mxu0 0
        %787 = vmatprep.subr.bf16.mxu0 0
        %788 = vmatpush1.bf16.msra.mxu0 0
        %789 = vmatprep.subr.bf16.mxu0 0
        %790 = vmatpush1.bf16.msra.mxu0 0
        %791 = vmatprep.subr.bf16.mxu0 0
        %792 = vmatpush1.bf16.msra.mxu0 %v775
        %793 = vmatprep.subr.bf16.mxu0 0
        %794 = vmatpush2.bf16.msra.mxu0 0
        %795 = vmatprep.subr.bf16.mxu0 0
        %796 = vmatpush2.bf16.msra.mxu0 0
        %797 = vmatprep.subr.bf16.mxu0 0
        %798 = vmatpush2.bf16.msra.mxu0 0
        %799 = vmatprep.subr.bf16.mxu0 0
        %800 = vmatpush2.bf16.msra.mxu0 0
        %801 = vmatprep.subr.bf16.mxu0 0
        %802 = vmatpush2.bf16.msra.mxu0 0
        %803 = vmatprep.subr.bf16.mxu0 0
        %804 = vmatpush2.bf16.msra.mxu0 0
        %805 = vmatprep.subr.bf16.mxu0 0
        %806 = vmatpush2.bf16.msra.mxu0 0
        %807 = vmatprep.subr.bf16.mxu0 0
        %808 = vmatpush2.bf16.msra.mxu0 0
        %809 = vmatprep.mubr.bf16.mxu0 0
        %810 = vmatmul.mubr.bf16.gmra.mxu0 %v772
        %v811 = vpop.f32.mrf.mxu0
        %v812 = vadd.f32 0.0, %v811
        %v813 = vpop.f32.mrf.mxu0
        %v814 = vpop.f32.mrf.mxu0
        %v815 = vpop.f32.mrf.mxu0
        %816 = vdwg.mxu0
        %v817 = vadd.f32 %v763, %v812
        %v818 = vrcp.pop %v767
        %v819 = vmul.f32 %v817, %v818
        %v820 = vpack.c.bf16 %v819, %v819
        %v821 = vld [vmem:[#allocation8 + $0x8] sm:$0xf]
        %v823 = vsel %vm372, %v820, 0
        %v826 = vsel %vm440, %v821, 0
        %828 = vmatprep.subr.bf16.mxu0 0
        %829 = vmatpush1.bf16.msra.mxu0 0
        %830 = vmatprep.subr.bf16.mxu0 0
        %831 = vmatpush1.bf16.msra.mxu0 0
        %832 = vmatprep.subr.bf16.mxu0 0
        %833 = vmatpush1.bf16.msra.mxu0 0
        %834 = vmatprep.subr.bf16.mxu0 0
        %835 = vmatpush1.bf16.msra.mxu0 0
        %836 = vmatprep.subr.bf16.mxu0 0
        %837 = vmatpush1.bf16.msra.mxu0 0
        %838 = vmatprep.subr.bf16.mxu0 0
        %839 = vmatpush1.bf16.msra.mxu0 0
        %840 = vmatprep.subr.bf16.mxu0 0
        %841 = vmatpush1.bf16.msra.mxu0 0
        %842 = vmatprep.subr.bf16.mxu0 0
        %843 = vmatpush1.bf16.msra.mxu0 %v826
        %844 = vmatprep.subr.bf16.mxu0 0
        %845 = vmatpush2.bf16.msra.mxu0 0
        %846 = vmatprep.subr.bf16.mxu0 0
        %847 = vmatpush2.bf16.msra.mxu0 0
        %848 = vmatprep.subr.bf16.mxu0 0
        %849 = vmatpush2.bf16.msra.mxu0 0
        %850 = vmatprep.subr.bf16.mxu0 0
        %851 = vmatpush2.bf16.msra.mxu0 0
        %852 = vmatprep.subr.bf16.mxu0 0
        %853 = vmatpush2.bf16.msra.mxu0 0
        %854 = vmatprep.subr.bf16.mxu0 0
        %855 = vmatpush2.bf16.msra.mxu0 0
        %856 = vmatprep.subr.bf16.mxu0 0
        %857 = vmatpush2.bf16.msra.mxu0 0
        %858 = vmatprep.subr.bf16.mxu0 0
        %859 = vmatpush2.bf16.msra.mxu0 0
        %860 = vmatprep.mubr.bf16.mxu0 0
        %861 = vmatmul.mubr.bf16.gmra.mxu0 %v823
        %v862 = vpop.f32.mrf.mxu0
        %v863 = vadd.f32 0.0, %v862
        %v864 = vpop.f32.mrf.mxu0
        %v865 = vpop.f32.mrf.mxu0
        %v866 = vpop.f32.mrf.mxu0
        %867 = vdwg.mxu0
        %v868 = vadd.f32 %v698, %v863
        %869 = vrot.lane.b32.xlu0 %v491, 104
        %v870 = vpop.permute.xlu0 %869
        %871 = vrot.lane.b32.xlu0 %v369, 72
        %v872 = vpop.permute.xlu0 %871
        %v874 = vsel %vm372, %v870, 0
        %v877 = vsel %vm372, %v872, 0
        %879 = vmatprep.subr.bf16.mxu0 0
        %880 = vmatpush1.bf16.xpose.msra.mxu0 0
        %881 = vmatprep.subr.bf16.mxu0 0
        %882 = vmatpush1.bf16.xpose.msra.mxu0 0
        %883 = vmatprep.subr.bf16.mxu0 0
        %884 = vmatpush1.bf16.xpose.msra.mxu0 0
        %885 = vmatprep.subr.bf16.mxu0 0
        %886 = vmatpush1.bf16.xpose.msra.mxu0 0
        %887 = vmatprep.subr.bf16.mxu0 0
        %888 = vmatpush1.bf16.xpose.msra.mxu0 0
        %889 = vmatprep.subr.bf16.mxu0 0
        %890 = vmatpush1.bf16.xpose.msra.mxu0 0
        %891 = vmatprep.subr.bf16.mxu0 0
        %892 = vmatpush1.bf16.xpose.msra.mxu0 0
        %893 = vmatprep.subr.bf16.mxu0 0
        %894 = vmatpush1.bf16.xpose.msra.mxu0 %v877
        %895 = vmatprep.subr.bf16.mxu0 0
        %896 = vmatpush2.bf16.xpose.msra.mxu0 0
        %897 = vmatprep.subr.bf16.mxu0 0
        %898 = vmatpush2.bf16.xpose.msra.mxu0 0
        %899 = vmatprep.subr.bf16.mxu0 0
        %900 = vmatpush2.bf16.xpose.msra.mxu0 0
        %901 = vmatprep.subr.bf16.mxu0 0
        %902 = vmatpush2.bf16.xpose.msra.mxu0 0
        %903 = vmatprep.subr.bf16.mxu0 0
        %904 = vmatpush2.bf16.xpose.msra.mxu0 0
        %905 = vmatprep.subr.bf16.mxu0 0
        %906 = vmatpush2.bf16.xpose.msra.mxu0 0
        %907 = vmatprep.subr.bf16.mxu0 0
        %908 = vmatpush2.bf16.xpose.msra.mxu0 0
        %909 = vmatprep.subr.bf16.mxu0 0
        %910 = vmatpush2.bf16.xpose.msra.mxu0 0
        %911 = vmatprep.mubr.bf16.mxu0 0
        %912 = vmatmul.mubr.bf16.gmra.mxu0 %v874
        %v913 = vpop.f32.mrf.mxu0
        %v914 = vadd.f32 0.0, %v913
        %v915 = vpop.f32.mrf.mxu0
        %v916 = vpop.f32.mrf.mxu0
        %v917 = vpop.f32.mrf.mxu0
        %918 = vdwg.mxu0
        %v919 = vmul.f32 %v914, 0.35355338
        %v920 = vsel %vm372, %v919, -inf
        %921 = vmax.xlane.f32.xlu0 %v920
        %v922 = vpop.xlane.xlu0 %921
        %v923 = vsub.f32 -inf, %v922
        %v924 = vmul.f32 %v923, 1.442695
        %v925 = vpow.pop %v924
        %v926 = vsub.f32 %v919, %v922
        %v927 = vmul.f32 %v926, 1.442695
        %v928 = vpow.pop %v927
        %v929 = vmul.f32 %v925, 0.0
        %v930 = vsel %vm372, %v928, 0.0
        %931 = vadd.xlane.f32.xlu0 %v930
        %v932 = vpop.xlane.xlu0 %931
        %v933 = vadd.f32 %v929, %v932
        %v934 = vpack.c.bf16 %v928, %v928
        %935 = vrot.lane.b32.xlu0 %v369, 40
        %v936 = vpop.permute.xlu0 %935
        %v938 = vsel %vm372, %v934, 0
        %v941 = vsel %vm440, %v936, 0
        %943 = vmatprep.subr.bf16.mxu0 0
        %944 = vmatpush1.bf16.msra.mxu0 0
        %945 = vmatprep.subr.bf16.mxu0 0
        %946 = vmatpush1.bf16.msra.mxu0 0
        %947 = vmatprep.subr.bf16.mxu0 0
        %948 = vmatpush1.bf16.msra.mxu0 0
        %949 = vmatprep.subr.bf16.mxu0 0
        %950 = vmatpush1.bf16.msra.mxu0 0
        %951 = vmatprep.subr.bf16.mxu0 0
        %952 = vmatpush1.bf16.msra.mxu0 0
        %953 = vmatprep.subr.bf16.mxu0 0
        %954 = vmatpush1.bf16.msra.mxu0 0
        %955 = vmatprep.subr.bf16.mxu0 0
        %956 = vmatpush1.bf16.msra.mxu0 0
        %957 = vmatprep.subr.bf16.mxu0 0
        %958 = vmatpush1.bf16.msra.mxu0 %v941
        %959 = vmatprep.subr.bf16.mxu0 0
        %960 = vmatpush2.bf16.msra.mxu0 0
        %961 = vmatprep.subr.bf16.mxu0 0
        %962 = vmatpush2.bf16.msra.mxu0 0
        %963 = vmatprep.subr.bf16.mxu0 0
        %964 = vmatpush2.bf16.msra.mxu0 0
        %965 = vmatprep.subr.bf16.mxu0 0
        %966 = vmatpush2.bf16.msra.mxu0 0
        %967 = vmatprep.subr.bf16.mxu0 0
        %968 = vmatpush2.bf16.msra.mxu0 0
        %969 = vmatprep.subr.bf16.mxu0 0
        %970 = vmatpush2.bf16.msra.mxu0 0
        %971 = vmatprep.subr.bf16.mxu0 0
        %972 = vmatpush2.bf16.msra.mxu0 0
        %973 = vmatprep.subr.bf16.mxu0 0
        %974 = vmatpush2.bf16.msra.mxu0 0
        %975 = vmatprep.mubr.bf16.mxu0 0
        %976 = vmatmul.mubr.bf16.gmra.mxu0 %v938
        %v977 = vpop.f32.mrf.mxu0
        %v978 = vadd.f32 0.0, %v977
        %v979 = vpop.f32.mrf.mxu0
        %v980 = vpop.f32.mrf.mxu0
        %v981 = vpop.f32.mrf.mxu0
        %982 = vdwg.mxu0
        %v983 = vadd.f32 %v929, %v978
        %v984 = vrcp.pop %v933
        %v985 = vmul.f32 %v983, %v984
        %v986 = vpack.c.bf16 %v985, %v985
        %v987 = vld [vmem:[#allocation8 + $0xc] sm:$0xf]
        %v989 = vsel %vm372, %v986, 0
        %v992 = vsel %vm440, %v987, 0
        %994 = vmatprep.subr.bf16.mxu0 0
        %995 = vmatpush1.bf16.msra.mxu0 0
        %996 = vmatprep.subr.bf16.mxu0 0
        %997 = vmatpush1.bf16.msra.mxu0 0
        %998 = vmatprep.subr.bf16.mxu0 0
        %999 = vmatpush1.bf16.msra.mxu0 0
        %1000 = vmatprep.subr.bf16.mxu0 0
        %1001 = vmatpush1.bf16.msra.mxu0 0
        %1002 = vmatprep.subr.bf16.mxu0 0
        %1003 = vmatpush1.bf16.msra.mxu0 0
        %1004 = vmatprep.subr.bf16.mxu0 0
        %1005 = vmatpush1.bf16.msra.mxu0 0
        %1006 = vmatprep.subr.bf16.mxu0 0
        %1007 = vmatpush1.bf16.msra.mxu0 0
        %1008 = vmatprep.subr.bf16.mxu0 0
        %1009 = vmatpush1.bf16.msra.mxu0 %v992
        %1010 = vmatprep.subr.bf16.mxu0 0
        %1011 = vmatpush2.bf16.msra.mxu0 0
        %1012 = vmatprep.subr.bf16.mxu0 0
        %1013 = vmatpush2.bf16.msra.mxu0 0
        %1014 = vmatprep.subr.bf16.mxu0 0
        %1015 = vmatpush2.bf16.msra.mxu0 0
        %1016 = vmatprep.subr.bf16.mxu0 0
        %1017 = vmatpush2.bf16.msra.mxu0 0
        %1018 = vmatprep.subr.bf16.mxu0 0
        %1019 = vmatpush2.bf16.msra.mxu0 0
        %1020 = vmatprep.subr.bf16.mxu0 0
        %1021 = vmatpush2.bf16.msra.mxu0 0
        %1022 = vmatprep.subr.bf16.mxu0 0
        %1023 = vmatpush2.bf16.msra.mxu0 0
        %1024 = vmatprep.subr.bf16.mxu0 0
        %1025 = vmatpush2.bf16.msra.mxu0 0
        %1026 = vmatprep.mubr.bf16.mxu0 0
        %1027 = vmatmul.mubr.bf16.gmra.mxu0 %v989
        %v1028 = vpop.f32.mrf.mxu0
        %v1029 = vadd.f32 0.0, %v1028
        %v1030 = vpop.f32.mrf.mxu0
        %v1031 = vpop.f32.mrf.mxu0
        %v1032 = vpop.f32.mrf.mxu0
        %1033 = vdwg.mxu0
        %v1034 = vadd.f32 %v868, %v1029
        %v1035 = vld [vmem:[%s4] sm:$0x1]
        %v1037 = vlaneseq
        %v1038 = vshrl.u32 %v1037, 7
        %v1039 = vsub.s32 0, %v1038
        %v1040 = vrot.slane %v1035, %v1039
        %v1042 = vadd.f32 %v1034, %v1040
        %vm1043 = vcmask 261120
        %1044 = vst.msk [vmem:[%s282] sm:$0xff] %vm1043, %v1042
        %s1045 = sand.u32 %s155, 1
        %s1046 = scalar_lea.sflag [#allocation5], %s1045
        %s1047 = sand.u32 %s155, 1
        %s1048 = smul.addr %s1047, 8
        %s1049 = scalar_lea.vmem [#allocation9], %s1048
        // Predicated region
        $region57: #{tpu_custom_call.1} parent=39 // pred_check
          %p1050 = pneg %p165
        $region58: #{tpu_custom_call.1} parent=39 // pred_check_branch
          %1052 = sbr.rel (%p1050) target = $region60
        $region59: #{tpu_custom_call.1} parent=39 // pred_region
          %s1054 = ssub.s32 128, 128
          %1055 = vsyncadd %s1046, %s1054
          %s1056 = sadd.s32 %s28, %s27
          %s1057 = smul.addr %s1056, 128
          %s1058 = scalar_lea.hbm %s5, %s1057
          %s1060 = sshll.u32 %s1049, 4
          %s1061 = int_to_ptr.vmem [resolvable:$true] %s1060
          %1063 = dma.vmem_to_hbm [thread:$0]  %s1061, 128, %s1058, %s1046
        $region60: #{tpu_custom_call.1} parent=39 // pred_fallthru
          _
      $region40: #{tpu_custom_call.1} parent=5 // pred_fallthru
        _
      %p1064 = scmp.le.s32.totalorder 2, %s18
      // Predicated region
      $region61: #{tpu_custom_call.1} parent=5 // pred_check
        %p1065 = pneg %p1064
      $region62: #{tpu_custom_call.1} parent=5 // pred_check_branch
        %1067 = sbr.rel (%p1065) target = $region64
      $region63: #{tpu_custom_call.1} parent=5 // pred_region
        %s1068 = ssub.s32 %s18, 2
        // Predicated region
        $region65: #{tpu_custom_call.1} parent=63 // pred_check
          %p1069 = pneg %p171
        $region66: #{tpu_custom_call.1} parent=63 // pred_check_branch
          %1071 = sbr.rel (%p1069) target = $region68
        $region67: #{tpu_custom_call.1} parent=63 // pred_region
          %s1072 = sand.u32 %s156, 1
          %s1073 = scalar_lea.sflag [#allocation5], %s1072
          %s1074 = sand.u32 %s156, 1
          %s1075 = smul.addr %s1074, 8
          %s1076 = scalar_lea.vmem [#allocation9], %s1075
          %1077 = dma.done %s1073, 128
        $region68: #{tpu_custom_call.1} parent=63 // pred_fallthru
          _
      $region64: #{tpu_custom_call.1} parent=5 // pred_fallthru
        _
    $region6: #{tpu_custom_call.1} parent=1 // loop_footer
      %s22 = sadd.s32 1, %s18
    $region7: #{tpu_custom_call.1} parent=1 // loop_footer_branch
      %17 = sbr.rel target = $region3
    $region8: #{tpu_custom_call.1} parent=1 // loop_exit
      _
    %1078 = vsyncpa [#allocation4], 1
    %s1079 = scalar_lea.sflag [#allocation4], 1
    %1080 = vsyncpa %s1079, 1
    %1081 = vsyncpa [#allocation7], 1
    %1082 = vsyncpa [#allocation5], 1
    %s1083 = scalar_lea.sflag [#allocation5], 1
    %1084 = vsyncpa %s1083, 1

// kernel: tpu_custom_call.1
$region0: #{tpu_custom_call.1}
  #allocation0 [shape = 'u32[]', space=smem, size = 0x4, offset = 0x4, fixed_abs, tag = 'smem constant byte address 0x4 - core index']
  #allocation1 [shape = 'u32[144,128]{1,0:T(1,128)}', space=vmem, size = 0x12000, scoped, tag = 'internal scratch']
  #allocation2 [shape = 'bf16[8,96]{1,0:T(8,128)(2,1)}', space=vmem, size = 0x800, scoped, tag = 'scratch operand']
  %s0 = inlined_call_operand.hbm [shape: f32[2,8,32], index: 0, kind: input, shape index: {}]
  %s1 = inlined_call_operand.hbm [shape: bf16[32,96], index: 1, kind: input, shape index: {}]
  %s2 = inlined_call_operand.vmem [shape: f32[1,96], index: 2, kind: input, shape index: {}]
  %s3 = inlined_call_operand.hbm [shape: bf16[32,32], index: 3, kind: input, shape index: {}]
  %s4 = inlined_call_operand.vmem [shape: f32[1,32], index: 4, kind: input, shape index: {}]
  %s5 = inlined_call_operand.hbm [shape: f32[2,8,32], index: 5, kind: output, shape index: {}]
  %s6 = sld [smem:[#allocation0]]
  $region69: #{tpu_custom_call.1} parent=0
    _
  %s8 = ssub.s32 1, %s6
  %s9 = scalar_select 0, %s8, %s6
  $region1: #{tpu_custom_call.1} parent=0
    #allocation3 [shape = 'u8[8192]{0}', space=vmem, size = 0x2000, scoped, tag = 'input window, operand 0']
    #allocation4 [shape = 's32[2]{0}', space=sflag, size = 0x8, scoped, tag = 'scoped memory for tpu_custom_call.1']
    #allocation5 [shape = 's32[2]{0}', space=sflag, size = 0x8, scoped, tag = 'scoped memory for tpu_custom_call.1']
    #allocation6 [shape = 'u8[8192]{0}', space=vmem, size = 0x2000, scoped, tag = 'input window, operand 1, single buffered']
    #allocation7 [shape = 's32[1]{0}', space=sflag, size = 0x4, scoped, tag = 'scoped memory for tpu_custom_call.1']
    #allocation8 [shape = 'u8[8192]{0}', space=vmem, size = 0x2000, scoped, tag = 'input window, operand 3, single buffered']
    #allocation9 [shape = 'u8[8192]{0}', space=vmem, size = 0x2000, scoped, tag = 'output window, operand 0']
    %10 = vsyncpa [#allocation4], 0
    %s11 = scalar_lea.sflag [#allocation4], 1
    %12 = vsyncpa %s11, 0
    %13 = vsyncpa [#allocation7], 0
    %14 = vsyncpa [#allocation5], 0
    %s15 = scalar_lea.sflag [#allocation5], 1
    %16 = vsyncpa %s15, 0
    loop: start=0, step=1, limit=4
    $region2: #{tpu_custom_call.1} parent=1 // loop_pre_header
      _
    $region3: #{tpu_custom_call.1} parent=1 // loop_header
      %s18 = sphi 0, %s22
      %p19 = scmp.ge.s32.totalorder %s18, 4
      %s25 = sphi 0, %s37
      %s26 = sphi 0, %s33
      %s27 = sphi 0, %s25
      %s28 = sphi 0, %s26
      %s29 = sphi 0, %s27
      %s30 = sphi 0, %s28
      %s40 = sphi 0, %s42
      %s43 = sphi 0, %s40
      %s44 = sphi 0, %s43
      %s60 = sphi 0, %s44
      %s64 = sphi 0, %s64
      %s66 = sphi 0, %s64
      %s67 = sphi 0, %s66
      %s81 = sphi 0, %s67
      %s85 = sphi 0, %s85
      %s87 = sphi 0, %s85
      %s88 = sphi 0, %s87
      %s102 = sphi 0, %s88
      %s106 = sphi 0, %s106
      %s108 = sphi 0, %s106
      %s109 = sphi 0, %s108
      %s123 = sphi 0, %s109
      %s127 = sphi 0, %s127
      %s129 = sphi 0, %s127
      %s130 = sphi 0, %s129
      %s144 = sphi 0, %s130
      %s152 = sphi 0, %s154
      %s155 = sphi 0, %s152
      %s156 = sphi 0, %s155
      %s172 = sphi 0, %s156
    $region4: #{tpu_custom_call.1} parent=1 // loop_header_branch
      %21 = sbr.rel (%p19) target = $region8
    $region5: #{tpu_custom_call.1} parent=1 // loop_body
      %s23 = ssub.s32 %s18, 1
      %s24 = ssub.s32 %s18, 2
      %s31 = sadd.s32 1, %s26
      %p32 = scmp.ge.s32.totalorder %s31, 1
      %s33 = scalar_select %p32, 0, %s31
      %s34 = sadd.s32 1, %s25
      %s35 = scalar_select %p32, %s34, %s25
      %p36 = scmp.ge.s32.totalorder %s35, 2
      %s37 = scalar_select %p36, 0, %s35
      %s38 = ssub.s32 %s25, %s37
      %p39 = scmp.eq.s32.totalorder %s38, 0
      %s41 = sadd.s32 %s40, 1
      %s42 = scalar_select %p39, %s40, %s41
      %p45 = pneg %p39
      %p46 = scmp.eq.s32.totalorder %s18, 1
      %p47 = por %p45, %p46
      %p48 = scmp.ne.s32.totalorder %s40, %s43
      %p49 = scmp.eq.s32.totalorder %s18, 0
      %p50 = por %p48, %p49
      %p51 = scmp.ne.s32.totalorder %s40, %s43
      %p52 = scmp.eq.s32.totalorder %s23, 1
      %p53 = por %p51, %p52
      %p54 = scmp.ne.s32.totalorder %s43, %s44
      %p55 = scmp.eq.s32.totalorder %s23, 0
      %p56 = por %p54, %p55
      %p57 = scmp.ne.s32.totalorder %s43, %s44
      %p58 = scmp.eq.s32.totalorder %s24, 1
      %p59 = por %p57, %p58
      %p61 = scmp.ne.s32.totalorder %s44, %s60
      %p62 = scmp.eq.s32.totalorder %s24, 0
      %p63 = por %p61, %p62
      %s65 = sadd.s32 %s64, 1
      %p68 = scmp.eq.s32.totalorder %s18, 1
      %p69 = scmp.ne.s32.totalorder %s64, %s66
      %p70 = scmp.eq.s32.totalorder %s18, 0
      %p71 = por %p69, %p70
      %p72 = scmp.ne.s32.totalorder %s64, %s66
      %p73 = scmp.eq.s32.totalorder %s23, 1
      %p74 = por %p72, %p73
      %p75 = scmp.ne.s32.totalorder %s66, %s67
      %p76 = scmp.eq.s32.totalorder %s23, 0
      %p77 = por %p75, %p76
      %p78 = scmp.ne.s32.totalorder %s66, %s67
      %p79 = scmp.eq.s32.totalorder %s24, 1
      %p80 = por %p78, %p79
      %p82 = scmp.ne.s32.totalorder %s67, %s81
      %p83 = scmp.eq.s32.totalorder %s24, 0
      %p84 = por %p82, %p83
      %s86 = sadd.s32 %s85, 1
      %p89 = scmp.eq.s32.totalorder %s18, 1
      %p90 = scmp.ne.s32.totalorder %s85, %s87
      %p91 = scmp.eq.s32.totalorder %s18, 0
      %p92 = por %p90, %p91
      %p93 = scmp.ne.s32.totalorder %s85, %s87
      %p94 = scmp.eq.s32.totalorder %s23, 1
      %p95 = por %p93, %p94
      %p96 = scmp.ne.s32.totalorder %s87, %s88
      %p97 = scmp.eq.s32.totalorder %s23, 0
      %p98 = por %p96, %p97
      %p99 = scmp.ne.s32.totalorder %s87, %s88
      %p100 = scmp.eq.s32.totalorder %s24, 1
      %p101 = por %p99, %p100
      %p103 = scmp.ne.s32.totalorder %s88, %s102
      %p104 = scmp.eq.s32.totalorder %s24, 0
      %p105 = por %p103, %p104
      %s107 = sadd.s32 %s106, 1
      %p110 = scmp.eq.s32.totalorder %s18, 1
      %p111 = scmp.ne.s32.totalorder %s106, %s108
      %p112 = scmp.eq.s32.totalorder %s18, 0
      %p113 = por %p111, %p112
      %p114 = scmp.ne.s32.totalorder %s106, %s108
      %p115 = scmp.eq.s32.totalorder %s23, 1
      %p116 = por %p114, %p115
      %p117 = scmp.ne.s32.totalorder %s108, %s109
      %p118 = scmp.eq.s32.totalorder %s23, 0
      %p119 = por %p117, %p118
      %p120 = scmp.ne.s32.totalorder %s108, %s109
      %p121 = scmp.eq.s32.totalorder %s24, 1
      %p122 = por %p120, %p121
      %p124 = scmp.ne.s32.totalorder %s109, %s123
      %p125 = scmp.eq.s32.totalorder %s24, 0
      %p126 = por %p124, %p125
      %s128 = sadd.s32 %s127, 1
      %p131 = scmp.eq.s32.totalorder %s18, 1
      %p132 = scmp.ne.s32.totalorder %s127, %s129
      %p133 = scmp.eq.s32.totalorder %s18, 0
      %p134 = por %p132, %p133
      %p135 = scmp.ne.s32.totalorder %s127, %s129
      %p136 = scmp.eq.s32.totalorder %s23, 1
      %p137 = por %p135, %p136
      %p138 = scmp.ne.s32.totalorder %s129, %s130
      %p139 = scmp.eq.s32.totalorder %s23, 0
      %p140 = por %p138, %p139
      %p141 = scmp.ne.s32.totalorder %s129, %s130
      %p142 = scmp.eq.s32.totalorder %s24, 1
      %p143 = por %p141, %p142
      %p145 = scmp.ne.s32.totalorder %s130, %s144
      %p146 = scmp.eq.s32.totalorder %s24, 0
      %p147 = por %p145, %p146
      %s148 = ssub.s32 %s25, %s37
      %s149 = ssub.s32 %s26, %s33
      %s150 = sor.u32 %s148, %s149
      %p151 = scmp.eq.s32.totalorder %s150, 0
      %s153 = sadd.s32 %s152, 1
      %s154 = scalar_select %p151, %s152, %s153
      %p157 = pneg %p151
      %p158 = scmp.eq.s32.totalorder %s18, 1
      %p159 = por %p157, %p158
      %p160 = scmp.ne.s32.totalorder %s152, %s155
      %p161 = scmp.eq.s32.totalorder %s18, 0
      %p162 = por %p160, %p161
      %p163 = scmp.ne.s32.totalorder %s152, %s155
      %p164 = scmp.eq.s32.totalorder %s23, 1
      %p165 = por %p163, %p164
      %p166 = scmp.ne.s32.totalorder %s155, %s156
      %p167 = scmp.eq.s32.totalorder %s23, 0
      %p168 = por %p166, %p167
      %p169 = scmp.ne.s32.totalorder %s155, %s156
      %p170 = scmp.eq.s32.totalorder %s24, 1
      %p171 = por %p169, %p170
      %p173 = scmp.ne.s32.totalorder %s156, %s172
      %p174 = scmp.eq.s32.totalorder %s24, 0
      %p175 = por %p173, %p174
      %p176 = scmp.le.s32.totalorder 1, %s18
      %p177 = scmp.lt.s32.totalorder %s18, 3
      %p178 = pnand %p176, %p177
      %p179 = pneg %p178
      // Predicated region
      $region9: #{tpu_custom_call.1} parent=5 // pred_check
        _
      $region10: #{tpu_custom_call.1} parent=5 // pred_check_branch
        %181 = sbr.rel (%p178) target = $region12
      $region11: #{tpu_custom_call.1} parent=5 // pred_region
        %s182 = ssub.s32 %s18, 1
        // Predicated region
        $region13: #{tpu_custom_call.1} parent=11 // pred_check
          %p183 = pneg %p77
        $region14: #{tpu_custom_call.1} parent=11 // pred_check_branch
          %185 = sbr.rel (%p183) target = $region16
        $region15: #{tpu_custom_call.1} parent=11 // pred_region
          %s187 = ssub.s32 256, 256
          %188 = vsyncadd [#allocation7], %s187
          %s189 = sshll.u32 [#allocation6], 4
          %s190 = int_to_ptr.vmem [resolvable:$true] %s189
          %195 = dma.hbm_to_vmem [thread:$0]  %s1, 256, %s190, [#allocation7], 64, 64, 4
        $region16: #{tpu_custom_call.1} parent=11 // pred_fallthru
          _
        // Predicated region
        $region17: #{tpu_custom_call.1} parent=11 // pred_check
          %p196 = pneg %p98
        $region18: #{tpu_custom_call.1} parent=11 // pred_check_branch
          %198 = sbr.rel (%p196) target = $region20
        $region19: #{tpu_custom_call.1} parent=11 // pred_region
          _
        $region20: #{tpu_custom_call.1} parent=11 // pred_fallthru
          _
        // Predicated region
        $region21: #{tpu_custom_call.1} parent=11 // pred_check
          %p199 = pneg %p119
        $region22: #{tpu_custom_call.1} parent=11 // pred_check_branch
          %201 = sbr.rel (%p199) target = $region24
        $region23: #{tpu_custom_call.1} parent=11 // pred_region
          %s203 = ssub.s32 256, 256
          %204 = vsyncadd [#allocation7], %s203
          %s205 = sshll.u32 [#allocation8], 4
          %s206 = int_to_ptr.vmem [resolvable:$true] %s205
          %211 = dma.hbm_to_vmem [thread:$0]  %s3, 256, %s206, [#allocation7], 64, 64, 4
        $region24: #{tpu_custom_call.1} parent=11 // pred_fallthru
          _
        // Predicated region
        $region25: #{tpu_custom_call.1} parent=11 // pred_check
          %p212 = pneg %p140
        $region26: #{tpu_custom_call.1} parent=11 // pred_check_branch
          %214 = sbr.rel (%p212) target = $region28
        $region27: #{tpu_custom_call.1} parent=11 // pred_region
          _
        $region28: #{tpu_custom_call.1} parent=11 // pred_fallthru
          _
      $region12: #{tpu_custom_call.1} parent=5 // pred_fallthru
        _
      %p215 = scmp.lt.s32.totalorder %s18, 2
      // Predicated region
      $region29: #{tpu_custom_call.1} parent=5 // pred_check
        %p216 = pneg %p215
      $region30: #{tpu_custom_call.1} parent=5 // pred_check_branch
        %218 = sbr.rel (%p216) target = $region32
      $region31: #{tpu_custom_call.1} parent=5 // pred_region
        // Predicated region
        $region33: #{tpu_custom_call.1} parent=31 // pred_check
          %p219 = pneg %p50
        $region34: #{tpu_custom_call.1} parent=31 // pred_check_branch
          %221 = sbr.rel (%p219) target = $region36
        $region35: #{tpu_custom_call.1} parent=31 // pred_region
          %s222 = sand.u32 %s40, 1
          %s223 = scalar_lea.sflag [#allocation4], %s222
          %s224 = sand.u32 %s40, 1
          %s225 = smul.addr %s224, 8
          %s226 = scalar_lea.vmem [#allocation3], %s225
          %s228 = ssub.s32 128, 128
          %229 = vsyncadd %s223, %s228
          %s230 = smul.addr %s25, 128
          %s231 = scalar_lea.hbm %s0, %s230
          %s233 = sshll.u32 %s226, 4
          %s234 = int_to_ptr.vmem [resolvable:$true] %s233
          %236 = dma.hbm_to_vmem [thread:$0]  %s231, 128, %s234, %s223
        $region36: #{tpu_custom_call.1} parent=31 // pred_fallthru
          _
      $region32: #{tpu_custom_call.1} parent=5 // pred_fallthru
        _
      %p237 = scmp.le.s32.totalorder 1, %s18
      %p238 = scmp.lt.s32.totalorder %s18, 3
      %p239 = pnand %p237, %p238
      %p240 = pneg %p239
      // Predicated region
      $region37: #{tpu_custom_call.1} parent=5 // pred_check
        _
      $region38: #{tpu_custom_call.1} parent=5 // pred_check_branch
        %242 = sbr.rel (%p239) target = $region40
      $region39: #{tpu_custom_call.1} parent=5 // pred_region
        %s243 = ssub.s32 %s18, 1
        %s244 = sand.u32 %s43, 1
        %s245 = scalar_lea.sflag [#allocation4], %s244
        %s246 = sand.u32 %s43, 1
        %s247 = smul.addr %s246, 8
        %s248 = scalar_lea.vmem [#allocation3], %s247
        // Predicated region
        $region41: #{tpu_custom_call.1} parent=39 // pred_check
          %p249 = pneg %p56
        $region42: #{tpu_custom_call.1} parent=39 // pred_check_branch
          %251 = sbr.rel (%p249) target = $region44
        $region43: #{tpu_custom_call.1} parent=39 // pred_region
          %252 = dma.done %s245, 128
        $region44: #{tpu_custom_call.1} parent=39 // pred_fallthru
          _
        // Predicated region
        $region45: #{tpu_custom_call.1} parent=39 // pred_check
          %p253 = pneg %p77
        $region46: #{tpu_custom_call.1} parent=39 // pred_check_branch
          %255 = sbr.rel (%p253) target = $region48
        $region47: #{tpu_custom_call.1} parent=39 // pred_region
          %256 = dma.done [#allocation7], 256
        $region48: #{tpu_custom_call.1} parent=39 // pred_fallthru
          _
        // Predicated region
        $region49: #{tpu_custom_call.1} parent=39 // pred_check
          %p257 = pneg %p119
        $region50: #{tpu_custom_call.1} parent=39 // pred_check_branch
          %259 = sbr.rel (%p257) target = $region52
        $region51: #{tpu_custom_call.1} parent=39 // pred_region
          %260 = dma.done [#allocation7], 256
        $region52: #{tpu_custom_call.1} parent=39 // pred_fallthru
          _
        %s261 = sand.u32 %s43, 1
        %s262 = scalar_lea.sflag [#allocation4], %s261
        %s263 = sand.u32 %s43, 1
        %s264 = smul.addr %s263, 8
        %s265 = scalar_lea.vmem [#allocation3], %s264
        %p266 = pneg %p56
        %p267 = pneg %p53
        %p268 = pneg %p77
        %p269 = pneg %p74
        %p270 = pneg %p98
        %p271 = pneg %p95
        %p272 = pneg %p119
        %p273 = pneg %p116
        %p274 = pneg %p140
        %p275 = pneg %p137
        %p276 = pneg %p168
        %p277 = pneg %p165
        %s278 = sand.u32 %s155, 1
        %s279 = scalar_lea.sflag [#allocation5], %s278
        %s280 = sand.u32 %s155, 1
        %s281 = smul.addr %s280, 8
        %s282 = scalar_lea.vmem [#allocation9], %s281
        %p284 = scmp.eq.s32.totalorder %s28, 0
        // Predicated region
        $region53: #{tpu_custom_call.1} parent=39 // pred_check
          %p285 = pneg %p284
        $region54: #{tpu_custom_call.1} parent=39 // pred_check_branch
          %287 = sbr.rel (%p285) target = $region56
        $region55: #{tpu_custom_call.1} parent=39 // pred_region
          %v288 = vld [vmem:[%s248] sm:$0xff]
          %v289 = vpack.c.bf16 %v288, %v288
          %v290 = vld [vmem:[#allocation6] sm:$0xf]
          %v291 = vld [vmem:[#allocation6 + $0x4] sm:$0xf]
          %v292 = vld [vmem:[#allocation6 + $0x8] sm:$0xf]
          %v293 = vld [vmem:[#allocation6 + $0xc] sm:$0xf]
          %v294 = vld [vmem:[%s2] sm:$0x1]
          %v296 = vlaneseq
          %v297 = vshrl.u32 %v296, 7
          %v298 = vsub.s32 0, %v297
          %v299 = vrot.slane %v294, %v298
          %v305 = vunpack.c.l.b16 %v290
          %v306 = vunpack.c.l.b16 %v291
          %v307 = vunpack.c.l.b16 %v292
          %v308 = vunpack.c.l.b16 %v293
          %v309 = vpack.c.b16 %v306, %v305
          %v310 = vpack.c.b16 %v308, %v307
          %vm313 = vcmask 261120
          %v315 = vsel %vm313, %v289, 0
          %317 = vmatprep.subr.bf16.mxu0 0
          %318 = vmatpush1.bf16.msra.mxu0 0
          %319 = vmatprep.subr.bf16.mxu0 0
          %320 = vmatpush1.bf16.msra.mxu0 0
          %321 = vmatprep.subr.bf16.mxu0 0
          %322 = vmatpush1.bf16.msra.mxu0 0
          %323 = vmatprep.subr.bf16.mxu0 0
          %324 = vmatpush1.bf16.msra.mxu0 0
          %325 = vmatprep.subr.bf16.mxu0 0
          %326 = vmatpush1.bf16.msra.mxu0 0
          %327 = vmatprep.subr.bf16.mxu0 0
          %328 = vmatpush1.bf16.msra.mxu0 0
          %329 = vmatprep.subr.bf16.mxu0 0
          %330 = vmatpush1.bf16.msra.mxu0 %v310
          %331 = vmatprep.subr.bf16.mxu0 0
          %332 = vmatpush1.bf16.msra.mxu0 %v309
          %333 = vmatprep.subr.bf16.mxu0 0
          %334 = vmatpush2.bf16.msra.mxu0 0
          %335 = vmatprep.subr.bf16.mxu0 0
          %336 = vmatpush2.bf16.msra.mxu0 0
          %337 = vmatprep.subr.bf16.mxu0 0
          %338 = vmatpush2.bf16.msra.mxu0 0
          %339 = vmatprep.subr.bf16.mxu0 0
          %340 = vmatpush2.bf16.msra.mxu0 0
          %341 = vmatprep.subr.bf16.mxu0 0
          %342 = vmatpush2.bf16.msra.mxu0 0
          %343 = vmatprep.subr.bf16.mxu0 0
          %344 = vmatpush2.bf16.msra.mxu0 0
          %345 = vmatprep.subr.bf16.mxu0 0
          %346 = vmatpush2.bf16.msra.mxu0 0
          %347 = vmatprep.subr.bf16.mxu0 0
          %348 = vmatpush2.bf16.msra.mxu0 0
          %349 = vmatprep.mubr.bf16.mxu0 0
          %350 = vmatmul.mubr.bf16.gmra.mxu0 %v315
          %v351 = vpop.f32.mrf.mxu0
          %v352 = vadd.f32 %v299, %v351
          %v353 = vpop.f32.mrf.mxu0
          %v354 = vpop.f32.mrf.mxu0
          %v355 = vpop.f32.mrf.mxu0
          %356 = vdwg.mxu0
          %v357 = vpack.c.bf16 %v352, %v352
          %vm358 = vcmask 781312
          %359 = vst.msk [vmem:[#allocation2] sm:$0xf] %vm358, %v357
        $region56: #{tpu_custom_call.1} parent=39 // pred_fallthru
          _
        %s360 = smul.u32 %s28, 8
        %s361 = sshra.s32 %s360, 3
        %s362 = sand.u32 %s360, 7
        %s363 = smul.addr %s361, 4
        %s364 = scalar_lea.vmem [#allocation2], %s363
        %v365 = vld [vmem:[%s364] sm:$0xf]
        %v366 = vld [vmem:[#allocation2] sm:$0xf]
        %v368 = vunpack.c.l.b16 %v366
        %v369 = vpack.c.b16 %v368, %v368
        %370 = vrot.lane.b32.xlu0 %v369, 96
        %v371 = vpop.permute.xlu0 %370
        %vm372 = vcmask 64512
        %v374 = vsel %vm372, %v365, 0
        %v377 = vsel %vm372, %v371, 0
        %379 = vmatprep.subr.bf16.mxu0 0
        %380 = vmatpush1.bf16.xpose.msra.mxu0 0
        %381 = vmatprep.subr.bf16.mxu0 0
        %382 = vmatpush1.bf16.xpose.msra.mxu0 0
        %383 = vmatprep.subr.bf16.mxu0 0
        %384 = vmatpush1.bf16.xpose.msra.mxu0 0
        %385 = vmatprep.subr.bf16.mxu0 0
        %386 = vmatpush1.bf16.xpose.msra.mxu0 0
        %387 = vmatprep.subr.bf16.mxu0 0
        %388 = vmatpush1.bf16.xpose.msra.mxu0 0
        %389 = vmatprep.subr.bf16.mxu0 0
        %390 = vmatpush1.bf16.xpose.msra.mxu0 0
        %391 = vmatprep.subr.bf16.mxu0 0
        %392 = vmatpush1.bf16.xpose.msra.mxu0 0
        %393 = vmatprep.subr.bf16.mxu0 0
        %394 = vmatpush1.bf16.xpose.msra.mxu0 %v377
        %395 = vmatprep.subr.bf16.mxu0 0
        %396 = vmatpush2.bf16.xpose.msra.mxu0 0
        %397 = vmatprep.subr.bf16.mxu0 0
        %398 = vmatpush2.bf16.xpose.msra.mxu0 0
        %399 = vmatprep.subr.bf16.mxu0 0
        %400 = vmatpush2.bf16.xpose.msra.mxu0 0
        %401 = vmatprep.subr.bf16.mxu0 0
        %402 = vmatpush2.bf16.xpose.msra.mxu0 0
        %403 = vmatprep.subr.bf16.mxu0 0
        %404 = vmatpush2.bf16.xpose.msra.mxu0 0
        %405 = vmatprep.subr.bf16.mxu0 0
        %406 = vmatpush2.bf16.xpose.msra.mxu0 0
        %407 = vmatprep.subr.bf16.mxu0 0
        %408 = vmatpush2.bf16.xpose.msra.mxu0 0
        %409 = vmatprep.subr.bf16.mxu0 0
        %410 = vmatpush2.bf16.xpose.msra.mxu0 0
        %411 = vmatprep.mubr.bf16.mxu0 0
        %412 = vmatmul.mubr.bf16.gmra.mxu0 %v374
        %v413 = vpop.f32.mrf.mxu0
        %v414 = vadd.f32 0.0, %v413
        %v415 = vpop.f32.mrf.mxu0
        %v416 = vpop.f32.mrf.mxu0
        %v417 = vpop.f32.mrf.mxu0
        %418 = vdwg.mxu0
        %v419 = vmul.f32 %v414, 0.35355338
        %v420 = vsel %vm372, %v419, -inf
        %421 = vmax.xlane.f32.xlu0 %v420
        %v422 = vpop.xlane.xlu0 %421
        %v423 = vsub.f32 -inf, %v422
        %v424 = vmul.f32 %v423, 1.442695
        %v425 = vpow.pop %v424
        %v426 = vsub.f32 %v419, %v422
        %v427 = vmul.f32 %v426, 1.442695
        %v428 = vpow.pop %v427
        %v429 = vmul.f32 %v425, 0.0
        %v430 = vsel %vm372, %v428, 0.0
        %431 = vadd.xlane.f32.xlu0 %v430
        %v432 = vpop.xlane.xlu0 %431
        %v433 = vadd.f32 %v429, %v432
        %v434 = vpack.c.bf16 %v428, %v428
        %435 = vrot.lane.b32.xlu0 %v369, 64
        %v436 = vpop.permute.xlu0 %435
        %v438 = vsel %vm372, %v434, 0
        %vm440 = vcmask 1043456
        %v442 = vsel %vm440, %v436, 0
        %444 = vmatprep.subr.bf16.mxu0 0
        %445 = vmatpush1.bf16.msra.mxu0 0
        %446 = vmatprep.subr.bf16.mxu0 0
        %447 = vmatpush1.bf16.msra.mxu0 0
        %448 = vmatprep.subr.bf16.mxu0 0
        %449 = vmatpush1.bf16.msra.mxu0 0
        %450 = vmatprep.subr.bf16.mxu0 0
        %451 = vmatpush1.bf16.msra.mxu0 0
        %452 = vmatprep.subr.bf16.mxu0 0
        %453 = vmatpush1.bf16.msra.mxu0 0
        %454 = vmatprep.subr.bf16.mxu0 0
        %455 = vmatpush1.bf16.msra.mxu0 0
        %456 = vmatprep.subr.bf16.mxu0 0
        %457 = vmatpush1.bf16.msra.mxu0 0
        %458 = vmatprep.subr.bf16.mxu0 0
        %459 = vmatpush1.bf16.msra.mxu0 %v442
        %460 = vmatprep.subr.bf16.mxu0 0
        %461 = vmatpush2.bf16.msra.mxu0 0
        %462 = vmatprep.subr.bf16.mxu0 0
        %463 = vmatpush2.bf16.msra.mxu0 0
        %464 = vmatprep.subr.bf16.mxu0 0
        %465 = vmatpush2.bf16.msra.mxu0 0
        %466 = vmatprep.subr.bf16.mxu0 0
        %467 = vmatpush2.bf16.msra.mxu0 0
        %468 = vmatprep.subr.bf16.mxu0 0
        %469 = vmatpush2.bf16.msra.mxu0 0
        %470 = vmatprep.subr.bf16.mxu0 0
        %471 = vmatpush2.bf16.msra.mxu0 0
        %472 = vmatprep.subr.bf16.mxu0 0
        %473 = vmatpush2.bf16.msra.mxu0 0
        %474 = vmatprep.subr.bf16.mxu0 0
        %475 = vmatpush2.bf16.msra.mxu0 0
        %476 = vmatprep.mubr.bf16.mxu0 0
        %477 = vmatmul.mubr.bf16.gmra.mxu0 %v438
        %v478 = vpop.f32.mrf.mxu0
        %v479 = vadd.f32 0.0, %v478
        %v480 = vpop.f32.mrf.mxu0
        %v481 = vpop.f32.mrf.mxu0
        %v482 = vpop.f32.mrf.mxu0
        %483 = vdwg.mxu0
        %v484 = vadd.f32 %v429, %v479
        %v485 = vrcp.pop %v433
        %v486 = vmul.f32 %v484, %v485
        %v487 = vpack.c.bf16 %v486, %v486
        %v488 = vld [vmem:[#allocation8] sm:$0xf]
        %v490 = vunpack.c.l.b16 %v365
        %v491 = vpack.c.b16 %v490, %v490
        %492 = vrot.lane.b32.xlu0 %v491, 120
        %v493 = vpop.permute.xlu0 %492
        %494 = vrot.lane.b32.xlu0 %v369, 88
        %v495 = vpop.permute.xlu0 %494
        %v497 = vsel %vm372, %v493, 0
        %v500 = vsel %vm372, %v495, 0
        %502 = vmatprep.subr.bf16.mxu0 0
        %503 = vmatpush1.bf16.xpose.msra.mxu0 0
        %504 = vmatprep.subr.bf16.mxu0 0
        %505 = vmatpush1.bf16.xpose.msra.mxu0 0
        %506 = vmatprep.subr.bf16.mxu0 0
        %507 = vmatpush1.bf16.xpose.msra.mxu0 0
        %508 = vmatprep.subr.bf16.mxu0 0
        %509 = vmatpush1.bf16.xpose.msra.mxu0 0
        %510 = vmatprep.subr.bf16.mxu0 0
        %511 = vmatpush1.bf16.xpose.msra.mxu0 0
        %512 = vmatprep.subr.bf16.mxu0 0
        %513 = vmatpush1.bf16.xpose.msra.mxu0 0
        %514 = vmatprep.subr.bf16.mxu0 0
        %515 = vmatpush1.bf16.xpose.msra.mxu0 0
        %516 = vmatprep.subr.bf16.mxu0 0
        %517 = vmatpush1.bf16.xpose.msra.mxu0 %v500
        %518 = vmatprep.subr.bf16.mxu0 0
        %519 = vmatpush2.bf16.xpose.msra.mxu0 0
        %520 = vmatprep.subr.bf16.mxu0 0
        %521 = vmatpush2.bf16.xpose.msra.mxu0 0
        %522 = vmatprep.subr.bf16.mxu0 0
        %523 = vmatpush2.bf16.xpose.msra.mxu0 0
        %524 = vmatprep.subr.bf16.mxu0 0
        %525 = vmatpush2.bf16.xpose.msra.mxu0 0
        %526 = vmatprep.subr.bf16.mxu0 0
        %527 = vmatpush2.bf16.xpose.msra.mxu0 0
        %528 = vmatprep.subr.bf16.mxu0 0
        %529 = vmatpush2.bf16.xpose.msra.mxu0 0
        %530 = vmatprep.subr.bf16.mxu0 0
        %531 = vmatpush2.bf16.xpose.msra.mxu0 0
        %532 = vmatprep.subr.bf16.mxu0 0
        %533 = vmatpush2.bf16.xpose.msra.mxu0 0
        %534 = vmatprep.mubr.bf16.mxu0 0
        %535 = vmatmul.mubr.bf16.gmra.mxu0 %v497
        %v536 = vpop.f32.mrf.mxu0
        %v537 = vadd.f32 0.0, %v536
        %v538 = vpop.f32.mrf.mxu0
        %v539 = vpop.f32.mrf.mxu0
        %v540 = vpop.f32.mrf.mxu0
        %541 = vdwg.mxu0
        %v542 = vmul.f32 %v537, 0.35355338
        %v543 = vsel %vm372, %v542, -inf
        %544 = vmax.xlane.f32.xlu0 %v543
        %v545 = vpop.xlane.xlu0 %544
        %v546 = vsub.f32 -inf, %v545
        %v547 = vmul.f32 %v546, 1.442695
        %v548 = vpow.pop %v547
        %v549 = vsub.f32 %v542, %v545
        %v550 = vmul.f32 %v549, 1.442695
        %v551 = vpow.pop %v550
        %v552 = vmul.f32 %v548, 0.0
        %v553 = vsel %vm372, %v551, 0.0
        %554 = vadd.xlane.f32.xlu0 %v553
        %v555 = vpop.xlane.xlu0 %554
        %v556 = vadd.f32 %v552, %v555
        %v557 = vpack.c.bf16 %v551, %v551
        %558 = vrot.lane.b32.xlu0 %v369, 56
        %v559 = vpop.permute.xlu0 %558
        %v561 = vsel %vm372, %v557, 0
        %v564 = vsel %vm440, %v559, 0
        %566 = vmatprep.subr.bf16.mxu0 0
        %567 = vmatpush1.bf16.msra.mxu0 0
        %568 = vmatprep.subr.bf16.mxu0 0
        %569 = vmatpush1.bf16.msra.mxu0 0
        %570 = vmatprep.subr.bf16.mxu0 0
        %571 = vmatpush1.bf16.msra.mxu0 0
        %572 = vmatprep.subr.bf16.mxu0 0
        %573 = vmatpush1.bf16.msra.mxu0 0
        %574 = vmatprep.subr.bf16.mxu0 0
        %575 = vmatpush1.bf16.msra.mxu0 0
        %576 = vmatprep.subr.bf16.mxu0 0
        %577 = vmatpush1.bf16.msra.mxu0 0
        %578 = vmatprep.subr.bf16.mxu0 0
        %579 = vmatpush1.bf16.msra.mxu0 0
        %580 = vmatprep.subr.bf16.mxu0 0
        %581 = vmatpush1.bf16.msra.mxu0 %v564
        %582 = vmatprep.subr.bf16.mxu0 0
        %583 = vmatpush2.bf16.msra.mxu0 0
        %584 = vmatprep.subr.bf16.mxu0 0
        %585 = vmatpush2.bf16.msra.mxu0 0
        %586 = vmatprep.subr.bf16.mxu0 0
        %587 = vmatpush2.bf16.msra.mxu0 0
        %588 = vmatprep.subr.bf16.mxu0 0
        %589 = vmatpush2.bf16.msra.mxu0 0
        %590 = vmatprep.subr.bf16.mxu0 0
        %591 = vmatpush2.bf16.msra.mxu0 0
        %592 = vmatprep.subr.bf16.mxu0 0
        %593 = vmatpush2.bf16.msra.mxu0 0
        %594 = vmatprep.subr.bf16.mxu0 0
        %595 = vmatpush2.bf16.msra.mxu0 0
        %596 = vmatprep.subr.bf16.mxu0 0
        %597 = vmatpush2.bf16.msra.mxu0 0
        %598 = vmatprep.mubr.bf16.mxu0 0
        %599 = vmatmul.mubr.bf16.gmra.mxu0 %v561
        %v600 = vpop.f32.mrf.mxu0
        %v601 = vadd.f32 0.0, %v600
        %v602 = vpop.f32.mrf.mxu0
        %v603 = vpop.f32.mrf.mxu0
        %v604 = vpop.f32.mrf.mxu0
        %605 = vdwg.mxu0
        %v606 = vadd.f32 %v552, %v601
        %v607 = vrcp.pop %v556
        %v608 = vmul.f32 %v606, %v607
        %v609 = vpack.c.bf16 %v608, %v608
        %v610 = vld [vmem:[#allocation8 + $0x4] sm:$0xf]
        %v612 = vsel %vm372, %v609, 0
        %v615 = vsel %vm440, %v610, 0
        %617 = vmatprep.subr.bf16.mxu0 0
        %618 = vmatpush1.bf16.msra.mxu0 0
        %619 = vmatprep.subr.bf16.mxu0 0
        %620 = vmatpush1.bf16.msra.mxu0 0
        %621 = vmatprep.subr.bf16.mxu0 0
        %622 = vmatpush1.bf16.msra.mxu0 0
        %623 = vmatprep.subr.bf16.mxu0 0
        %624 = vmatpush1.bf16.msra.mxu0 0
        %625 = vmatprep.subr.bf16.mxu0 0
        %626 = vmatpush1.bf16.msra.mxu0 0
        %627 = vmatprep.subr.bf16.mxu0 0
        %628 = vmatpush1.bf16.msra.mxu0 0
        %629 = vmatprep.subr.bf16.mxu0 0
        %630 = vmatpush1.bf16.msra.mxu0 0
        %631 = vmatprep.subr.bf16.mxu0 0
        %632 = vmatpush1.bf16.msra.mxu0 %v615
        %633 = vmatprep.subr.bf16.mxu0 0
        %634 = vmatpush2.bf16.msra.mxu0 0
        %635 = vmatprep.subr.bf16.mxu0 0
        %636 = vmatpush2.bf16.msra.mxu0 0
        %637 = vmatprep.subr.bf16.mxu0 0
        %638 = vmatpush2.bf16.msra.mxu0 0
        %639 = vmatprep.subr.bf16.mxu0 0
        %640 = vmatpush2.bf16.msra.mxu0 0
        %641 = vmatprep.subr.bf16.mxu0 0
        %642 = vmatpush2.bf16.msra.mxu0 0
        %643 = vmatprep.subr.bf16.mxu0 0
        %644 = vmatpush2.bf16.msra.mxu0 0
        %645 = vmatprep.subr.bf16.mxu0 0
        %646 = vmatpush2.bf16.msra.mxu0 0
        %647 = vmatprep.subr.bf16.mxu0 0
        %648 = vmatpush2.bf16.msra.mxu0 0
        %649 = vmatprep.mubr.bf16.mxu0 0
        %650 = vmatmul.mubr.bf16.gmra.mxu0 %v612
        %v651 = vpop.f32.mrf.mxu0
        %v652 = vadd.f32 0.0, %v651
        %v653 = vpop.f32.mrf.mxu0
        %v654 = vpop.f32.mrf.mxu0
        %v655 = vpop.f32.mrf.mxu0
        %656 = vdwg.mxu0
        %v658 = vsel %vm372, %v487, 0
        %v661 = vsel %vm440, %v488, 0
        %663 = vmatprep.subr.bf16.mxu0 0
        %664 = vmatpush1.bf16.msra.mxu0 0
        %665 = vmatprep.subr.bf16.mxu0 0
        %666 = vmatpush1.bf16.msra.mxu0 0
        %667 = vmatprep.subr.bf16.mxu0 0
        %668 = vmatpush1.bf16.msra.mxu0 0
        %669 = vmatprep.subr.bf16.mxu0 0
        %670 = vmatpush1.bf16.msra.mxu0 0
        %671 = vmatprep.subr.bf16.mxu0 0
        %672 = vmatpush1.bf16.msra.mxu0 0
        %673 = vmatprep.subr.bf16.mxu0 0
        %674 = vmatpush1.bf16.msra.mxu0 0
        %675 = vmatprep.subr.bf16.mxu0 0
        %676 = vmatpush1.bf16.msra.mxu0 0
        %677 = vmatprep.subr.bf16.mxu0 0
        %678 = vmatpush1.bf16.msra.mxu0 %v661
        %679 = vmatprep.subr.bf16.mxu0 0
        %680 = vmatpush2.bf16.msra.mxu0 0
        %681 = vmatprep.subr.bf16.mxu0 0
        %682 = vmatpush2.bf16.msra.mxu0 0
        %683 = vmatprep.subr.bf16.mxu0 0
        %684 = vmatpush2.bf16.msra.mxu0 0
        %685 = vmatprep.subr.bf16.mxu0 0
        %686 = vmatpush2.bf16.msra.mxu0 0
        %687 = vmatprep.subr.bf16.mxu0 0
        %688 = vmatpush2.bf16.msra.mxu0 0
        %689 = vmatprep.subr.bf16.mxu0 0
        %690 = vmatpush2.bf16.msra.mxu0 0
        %691 = vmatprep.subr.bf16.mxu0 0
        %692 = vmatpush2.bf16.msra.mxu0 0
        %693 = vmatprep.subr.bf16.mxu0 0
        %694 = vmatpush2.bf16.msra.mxu0 0
        %695 = vmatprep.mubr.bf16.mxu0 0
        %696 = vmatmul.mubr.bf16.gmra.mxu0 %v658
        %v697 = vpop.f32.mrf.mxu0
        %v698 = vadd.f32 %v652, %v697
        %v699 = vpop.f32.mrf.mxu0
        %v700 = vpop.f32.mrf.mxu0
        %v701 = vpop.f32.mrf.mxu0
        %702 = vdwg.mxu0
        %703 = vrot.lane.b32.xlu0 %v491, 112
        %v704 = vpop.permute.xlu0 %703
        %705 = vrot.lane.b32.xlu0 %v369, 80
        %v706 = vpop.permute.xlu0 %705
        %v708 = vsel %vm372, %v704, 0
        %v711 = vsel %vm372, %v706, 0
        %713 = vmatprep.subr.bf16.mxu0 0
        %714 = vmatpush1.bf16.xpose.msra.mxu0 0
        %715 = vmatprep.subr.bf16.mxu0 0
        %716 = vmatpush1.bf16.xpose.msra.mxu0 0
        %717 = vmatprep.subr.bf16.mxu0 0
        %718 = vmatpush1.bf16.xpose.msra.mxu0 0
        %719 = vmatprep.subr.bf16.mxu0 0
        %720 = vmatpush1.bf16.xpose.msra.mxu0 0
        %721 = vmatprep.subr.bf16.mxu0 0
        %722 = vmatpush1.bf16.xpose.msra.mxu0 0
        %723 = vmatprep.subr.bf16.mxu0 0
        %724 = vmatpush1.bf16.xpose.msra.mxu0 0
        %725 = vmatprep.subr.bf16.mxu0 0
        %726 = vmatpush1.bf16.xpose.msra.mxu0 0
        %727 = vmatprep.subr.bf16.mxu0 0
        %728 = vmatpush1.bf16.xpose.msra.mxu0 %v711
        %729 = vmatprep.subr.bf16.mxu0 0
        %730 = vmatpush2.bf16.xpose.msra.mxu0 0
        %731 = vmatprep.subr.bf16.mxu0 0
        %732 = vmatpush2.bf16.xpose.msra.mxu0 0
        %733 = vmatprep.subr.bf16.mxu0 0
        %734 = vmatpush2.bf16.xpose.msra.mxu0 0
        %735 = vmatprep.subr.bf16.mxu0 0
        %736 = vmatpush2.bf16.xpose.msra.mxu0 0
        %737 = vmatprep.subr.bf16.mxu0 0
        %738 = vmatpush2.bf16.xpose.msra.mxu0 0
        %739 = vmatprep.subr.bf16.mxu0 0
        %740 = vmatpush2.bf16.xpose.msra.mxu0 0
        %741 = vmatprep.subr.bf16.mxu0 0
        %742 = vmatpush2.bf16.xpose.msra.mxu0 0
        %743 = vmatprep.subr.bf16.mxu0 0
        %744 = vmatpush2.bf16.xpose.msra.mxu0 0
        %745 = vmatprep.mubr.bf16.mxu0 0
        %746 = vmatmul.mubr.bf16.gmra.mxu0 %v708
        %v747 = vpop.f32.mrf.mxu0
        %v748 = vadd.f32 0.0, %v747
        %v749 = vpop.f32.mrf.mxu0
        %v750 = vpop.f32.mrf.mxu0
        %v751 = vpop.f32.mrf.mxu0
        %752 = vdwg.mxu0
        %v753 = vmul.f32 %v748, 0.35355338
        %v754 = vsel %vm372, %v753, -inf
        %755 = vmax.xlane.f32.xlu0 %v754
        %v756 = vpop.xlane.xlu0 %755
        %v757 = vsub.f32 -inf, %v756
        %v758 = vmul.f32 %v757, 1.442695
        %v759 = vpow.pop %v758
        %v760 = vsub.f32 %v753, %v756
        %v761 = vmul.f32 %v760, 1.442695
        %v762 = vpow.pop %v761
        %v763 = vmul.f32 %v759, 0.0
        %v764 = vsel %vm372, %v762, 0.0
        %765 = vadd.xlane.f32.xlu0 %v764
        %v766 = vpop.xlane.xlu0 %765
        %v767 = vadd.f32 %v763, %v766
        %v768 = vpack.c.bf16 %v762, %v762
        %769 = vrot.lane.b32.xlu0 %v369, 48
        %v770 = vpop.permute.xlu0 %769
        %v772 = vsel %vm372, %v768, 0
        %v775 = vsel %vm440, %v770, 0
        %777 = vmatprep.subr.bf16.mxu0 0
        %778 = vmatpush1.bf16.msra.mxu0 0
        %779 = vmatprep.subr.bf16.mxu0 0
        %780 = vmatpush1.bf16.msra.mxu0 0
        %781 = vmatprep.subr.bf16.mxu0 0
        %782 = vmatpush1.bf16.msra.mxu0 0
        %783 = vmatprep.subr.bf16.mxu0 0
        %784 = vmatpush1.bf16.msra.mxu0 0
        %785 = vmatprep.subr.bf16.mxu0 0
        %786 = vmatpush1.bf16.msra.mxu0 0
        %787 = vmatprep.subr.bf16.mxu0 0
        %788 = vmatpush1.bf16.msra.mxu0 0
        %789 = vmatprep.subr.bf16.mxu0 0
        %790 = vmatpush1.bf16.msra.mxu0 0
        %791 = vmatprep.subr.bf16.mxu0 0
        %792 = vmatpush1.bf16.msra.mxu0 %v775
        %793 = vmatprep.subr.bf16.mxu0 0
        %794 = vmatpush2.bf16.msra.mxu0 0
        %795 = vmatprep.subr.bf16.mxu0 0
        %796 = vmatpush2.bf16.msra.mxu0 0
        %797 = vmatprep.subr.bf16.mxu0 0
        %798 = vmatpush2.bf16.msra.mxu0 0
        %799 = vmatprep.subr.bf16.mxu0 0
        %800 = vmatpush2.bf16.msra.mxu0 0
        %801 = vmatprep.subr.bf16.mxu0 0
        %802 = vmatpush2.bf16.msra.mxu0 0
        %803 = vmatprep.subr.bf16.mxu0 0
        %804 = vmatpush2.bf16.msra.mxu0 0
        %805 = vmatprep.subr.bf16.mxu0 0
        %806 = vmatpush2.bf16.msra.mxu0 0
        %807 = vmatprep.subr.bf16.mxu0 0
        %808 = vmatpush2.bf16.msra.mxu0 0
        %809 = vmatprep.mubr.bf16.mxu0 0
        %810 = vmatmul.mubr.bf16.gmra.mxu0 %v772
        %v811 = vpop.f32.mrf.mxu0
        %v812 = vadd.f32 0.0, %v811
        %v813 = vpop.f32.mrf.mxu0
        %v814 = vpop.f32.mrf.mxu0
        %v815 = vpop.f32.mrf.mxu0
        %816 = vdwg.mxu0
        %v817 = vadd.f32 %v763, %v812
        %v818 = vrcp.pop %v767
        %v819 = vmul.f32 %v817, %v818
        %v820 = vpack.c.bf16 %v819, %v819
        %v821 = vld [vmem:[#allocation8 + $0x8] sm:$0xf]
        %v823 = vsel %vm372, %v820, 0
        %v826 = vsel %vm440, %v821, 0
        %828 = vmatprep.subr.bf16.mxu0 0
        %829 = vmatpush1.bf16.msra.mxu0 0
        %830 = vmatprep.subr.bf16.mxu0 0
        %831 = vmatpush1.bf16.msra.mxu0 0
        %832 = vmatprep.subr.bf16.mxu0 0
        %833 = vmatpush1.bf16.msra.mxu0 0
        %834 = vmatprep.subr.bf16.mxu0 0
        %835 = vmatpush1.bf16.msra.mxu0 0
        %836 = vmatprep.subr.bf16.mxu0 0
        %837 = vmatpush1.bf16.msra.mxu0 0
        %838 = vmatprep.subr.bf16.mxu0 0
        %839 = vmatpush1.bf16.msra.mxu0 0
        %840 = vmatprep.subr.bf16.mxu0 0
        %841 = vmatpush1.bf16.msra.mxu0 0
        %842 = vmatprep.subr.bf16.mxu0 0
        %843 = vmatpush1.bf16.msra.mxu0 %v826
        %844 = vmatprep.subr.bf16.mxu0 0
        %845 = vmatpush2.bf16.msra.mxu0 0
        %846 = vmatprep.subr.bf16.mxu0 0
        %847 = vmatpush2.bf16.msra.mxu0 0
        %848 = vmatprep.subr.bf16.mxu0 0
        %849 = vmatpush2.bf16.msra.mxu0 0
        %850 = vmatprep.subr.bf16.mxu0 0
        %851 = vmatpush2.bf16.msra.mxu0 0
        %852 = vmatprep.subr.bf16.mxu0 0
        %853 = vmatpush2.bf16.msra.mxu0 0
        %854 = vmatprep.subr.bf16.mxu0 0
        %855 = vmatpush2.bf16.msra.mxu0 0
        %856 = vmatprep.subr.bf16.mxu0 0
        %857 = vmatpush2.bf16.msra.mxu0 0
        %858 = vmatprep.subr.bf16.mxu0 0
        %859 = vmatpush2.bf16.msra.mxu0 0
        %860 = vmatprep.mubr.bf16.mxu0 0
        %861 = vmatmul.mubr.bf16.gmra.mxu0 %v823
        %v862 = vpop.f32.mrf.mxu0
        %v863 = vadd.f32 0.0, %v862
        %v864 = vpop.f32.mrf.mxu0
        %v865 = vpop.f32.mrf.mxu0
        %v866 = vpop.f32.mrf.mxu0
        %867 = vdwg.mxu0
        %v868 = vadd.f32 %v698, %v863
        %869 = vrot.lane.b32.xlu0 %v491, 104
        %v870 = vpop.permute.xlu0 %869
        %871 = vrot.lane.b32.xlu0 %v369, 72
        %v872 = vpop.permute.xlu0 %871
        %v874 = vsel %vm372, %v870, 0
        %v877 = vsel %vm372, %v872, 0
        %879 = vmatprep.subr.bf16.mxu0 0
        %880 = vmatpush1.bf16.xpose.msra.mxu0 0
        %881 = vmatprep.subr.bf16.mxu0 0
        %882 = vmatpush1.bf16.xpose.msra.mxu0 0
        %883 = vmatprep.subr.bf16.mxu0 0
        %884 = vmatpush1.bf16.xpose.msra.mxu0 0
        %885 = vmatprep.subr.bf16.mxu0 0
        %886 = vmatpush1.bf16.xpose.msra.mxu0 0
        %887 = vmatprep.subr.bf16.mxu0 0
        %888 = vmatpush1.bf16.xpose.msra.mxu0 0
        %889 = vmatprep.subr.bf16.mxu0 0
        %890 = vmatpush1.bf16.xpose.msra.mxu0 0
        %891 = vmatprep.subr.bf16.mxu0 0
        %892 = vmatpush1.bf16.xpose.msra.mxu0 0
        %893 = vmatprep.subr.bf16.mxu0 0
        %894 = vmatpush1.bf16.xpose.msra.mxu0 %v877
        %895 = vmatprep.subr.bf16.mxu0 0
        %896 = vmatpush2.bf16.xpose.msra.mxu0 0
        %897 = vmatprep.subr.bf16.mxu0 0
        %898 = vmatpush2.bf16.xpose.msra.mxu0 0
        %899 = vmatprep.subr.bf16.mxu0 0
        %900 = vmatpush2.bf16.xpose.msra.mxu0 0
        %901 = vmatprep.subr.bf16.mxu0 0
        %902 = vmatpush2.bf16.xpose.msra.mxu0 0
        %903 = vmatprep.subr.bf16.mxu0 0
        %904 = vmatpush2.bf16.xpose.msra.mxu0 0
        %905 = vmatprep.subr.bf16.mxu0 0
        %906 = vmatpush2.bf16.xpose.msra.mxu0 0
        %907 = vmatprep.subr.bf16.mxu0 0
        %908 = vmatpush2.bf16.xpose.msra.mxu0 0
        %909 = vmatprep.subr.bf16.mxu0 0
        %910 = vmatpush2.bf16.xpose.msra.mxu0 0
        %911 = vmatprep.mubr.bf16.mxu0 0
        %912 = vmatmul.mubr.bf16.gmra.mxu0 %v874
        %v913 = vpop.f32.mrf.mxu0
        %v914 = vadd.f32 0.0, %v913
        %v915 = vpop.f32.mrf.mxu0
        %v916 = vpop.f32.mrf.mxu0
        %v917 = vpop.f32.mrf.mxu0
        %918 = vdwg.mxu0
        %v919 = vmul.f32 %v914, 0.35355338
        %v920 = vsel %vm372, %v919, -inf
        %921 = vmax.xlane.f32.xlu0 %v920
        %v922 = vpop.xlane.xlu0 %921
        %v923 = vsub.f32 -inf, %v922
        %v924 = vmul.f32 %v923, 1.442695
        %v925 = vpow.pop %v924
        %v926 = vsub.f32 %v919, %v922
        %v927 = vmul.f32 %v926, 1.442695
        %v928 = vpow.pop %v927
        %v929 = vmul.f32 %v925, 0.0
        %v930 = vsel %vm372, %v928, 0.0
        %931 = vadd.xlane.f32.xlu0 %v930
        %v932 = vpop.xlane.xlu0 %931
        %v933 = vadd.f32 %v929, %v932
        %v934 = vpack.c.bf16 %v928, %v928
        %935 = vrot.lane.b32.xlu0 %v369, 40
        %v936 = vpop.permute.xlu0 %935
        %v938 = vsel %vm372, %v934, 0
        %v941 = vsel %vm440, %v936, 0
        %943 = vmatprep.subr.bf16.mxu0 0
        %944 = vmatpush1.bf16.msra.mxu0 0
        %945 = vmatprep.subr.bf16.mxu0 0
        %946 = vmatpush1.bf16.msra.mxu0 0
        %947 = vmatprep.subr.bf16.mxu0 0
        %948 = vmatpush1.bf16.msra.mxu0 0
        %949 = vmatprep.subr.bf16.mxu0 0
        %950 = vmatpush1.bf16.msra.mxu0 0
        %951 = vmatprep.subr.bf16.mxu0 0
        %952 = vmatpush1.bf16.msra.mxu0 0
        %953 = vmatprep.subr.bf16.mxu0 0
        %954 = vmatpush1.bf16.msra.mxu0 0
        %955 = vmatprep.subr.bf16.mxu0 0
        %956 = vmatpush1.bf16.msra.mxu0 0
        %957 = vmatprep.subr.bf16.mxu0 0
        %958 = vmatpush1.bf16.msra.mxu0 %v941
        %959 = vmatprep.subr.bf16.mxu0 0
        %960 = vmatpush2.bf16.msra.mxu0 0
        %961 = vmatprep.subr.bf16.mxu0 0
        %962 = vmatpush2.bf16.msra.mxu0 0
        %963 = vmatprep.subr.bf16.mxu0 0
        %964 = vmatpush2.bf16.msra.mxu0 0
        %965 = vmatprep.subr.bf16.mxu0 0
        %966 = vmatpush2.bf16.msra.mxu0 0
        %967 = vmatprep.subr.bf16.mxu0 0
        %968 = vmatpush2.bf16.msra.mxu0 0
        %969 = vmatprep.subr.bf16.mxu0 0
        %970 = vmatpush2.bf16.msra.mxu0 0
        %971 = vmatprep.subr.bf16.mxu0 0
        %972 = vmatpush2.bf16.msra.mxu0 0
        %973 = vmatprep.subr.bf16.mxu0 0
        %974 = vmatpush2.bf16.msra.mxu0 0
        %975 = vmatprep.mubr.bf16.mxu0 0
        %976 = vmatmul.mubr.bf16.gmra.mxu0 %v938
        %v977 = vpop.f32.mrf.mxu0
        %v978 = vadd.f32 0.0, %v977
        %v979 = vpop.f32.mrf.mxu0
        %v980 = vpop.f32.mrf.mxu0
        %v981 = vpop.f32.mrf.mxu0
        %982 = vdwg.mxu0
        %v983 = vadd.f32 %v929, %v978
        %v984 = vrcp.pop %v933
        %v985 = vmul.f32 %v983, %v984
        %v986 = vpack.c.bf16 %v985, %v985
        %v987 = vld [vmem:[#allocation8 + $0xc] sm:$0xf]
        %v989 = vsel %vm372, %v986, 0
        %v992 = vsel %vm440, %v987, 0
        %994 = vmatprep.subr.bf16.mxu0 0
        %995 = vmatpush1.bf16.msra.mxu0 0
        %996 = vmatprep.subr.bf16.mxu0 0
        %997 = vmatpush1.bf16.msra.mxu0 0
        %998 = vmatprep.subr.bf16.mxu0 0
        %999 = vmatpush1.bf16.msra.mxu0 0
        %1000 = vmatprep.subr.bf16.mxu0 0
        %1001 = vmatpush1.bf16.msra.mxu0 0
        %1002 = vmatprep.subr.bf16.mxu0 0
        %1003 = vmatpush1.bf16.msra.mxu0 0
        %1004 = vmatprep.subr.bf16.mxu0 0
        %1005 = vmatpush1.bf16.msra.mxu0 0
        %1006 = vmatprep.subr.bf16.mxu0 0
        %1007 = vmatpush1.bf16.msra.mxu0 0
        %1008 = vmatprep.subr.bf16.mxu0 0
        %1009 = vmatpush1.bf16.msra.mxu0 %v992
        %1010 = vmatprep.subr.bf16.mxu0 0
        %1011 = vmatpush2.bf16.msra.mxu0 0
        %1012 = vmatprep.subr.bf16.mxu0 0
        %1013 = vmatpush2.bf16.msra.mxu0 0
        %1014 = vmatprep.subr.bf16.mxu0 0
        %1015 = vmatpush2.bf16.msra.mxu0 0
        %1016 = vmatprep.subr.bf16.mxu0 0
        %1017 = vmatpush2.bf16.msra.mxu0 0
        %1018 = vmatprep.subr.bf16.mxu0 0
        %1019 = vmatpush2.bf16.msra.mxu0 0
        %1020 = vmatprep.subr.bf16.mxu0 0
        %1021 = vmatpush2.bf16.msra.mxu0 0
        %1022 = vmatprep.subr.bf16.mxu0 0
        %1023 = vmatpush2.bf16.msra.mxu0 0
        %1024 = vmatprep.subr.bf16.mxu0 0
        %1025 = vmatpush2.bf16.msra.mxu0 0
        %1026 = vmatprep.mubr.bf16.mxu0 0
        %1027 = vmatmul.mubr.bf16.gmra.mxu0 %v989
        %v1028 = vpop.f32.mrf.mxu0
        %v1029 = vadd.f32 0.0, %v1028
        %v1030 = vpop.f32.mrf.mxu0
        %v1031 = vpop.f32.mrf.mxu0
        %v1032 = vpop.f32.mrf.mxu0
        %1033 = vdwg.mxu0
        %v1034 = vadd.f32 %v868, %v1029
        %v1035 = vld [vmem:[%s4] sm:$0x1]
        %v1037 = vlaneseq
        %v1038 = vshrl.u32 %v1037, 7
        %v1039 = vsub.s32 0, %v1038
        %v1040 = vrot.slane %v1035, %v1039
        %v1042 = vadd.f32 %v1034, %v1040
        %vm1043 = vcmask 261120
        %1044 = vst.msk [vmem:[%s282] sm:$0xff] %vm1043, %v1042
        %s1045 = sand.u32 %s155, 1
        %s1046 = scalar_lea.sflag [#allocation5], %s1045
        %s1047 = sand.u32 %s155, 1
        %s1048 = smul.addr %s1047, 8
        %s1049 = scalar_lea.vmem [#allocation9], %s1048
        // Predicated region
        $region57: #{tpu_custom_call.1} parent=39 // pred_check
          %p1050 = pneg %p165
        $region58: #{tpu_custom_call.1} parent=39 // pred_check_branch
          %1052 = sbr.rel (%p1050) target = $region60
        $region59: #{tpu_custom_call.1} parent=39 // pred_region
          %s1054 = ssub.s32 128, 128
          %1055 = vsyncadd %s1046, %s1054
          %s1056 = sadd.s32 %s28, %s27
          %s1057 = smul.addr %s1056, 128
          %s1058 = scalar_lea.hbm %s5, %s1057
          %s1060 = sshll.u32 %s1049, 4
          %s1061 = int_to_ptr.vmem [resolvable:$true] %s1060
          %1063 = dma.vmem_to_hbm [thread:$0]  %s1061, 128, %s1058, %s1046
        $region60: #{tpu_custom_call.1} parent=39 // pred_fallthru
          _
      $region40: #{tpu_custom_call.1} parent=5 // pred_fallthru
        _
      %p1064 = scmp.le.s32.totalorder 2, %s18
      // Predicated region
      $region61: #{tpu_custom_call.1} parent=5 // pred_check
        %p1065 = pneg %p1064
      $region62: #{tpu_custom_call.1} parent=5 // pred_check_branch
        %1067 = sbr.rel (%p1065) target = $region64
      $region63: #{tpu_custom_call.1} parent=5 // pred_region
        %s1068 = ssub.s32 %s18, 2
        // Predicated region
        $region65: #{tpu_custom_call.1} parent=63 // pred_check
          %p1069 = pneg %p171
        $region66: #{tpu_custom_call.1} parent=63 // pred_check_branch
          %1071 = sbr.rel (%p1069) target = $region68
        $region67: #{tpu_custom_call.1} parent=63 // pred_region
          %s1072 = sand.u32 %s156, 1
          %s1073 = scalar_lea.sflag [#allocation5], %s1072
          %s1074 = sand.u32 %s156, 1
          %s1075 = smul.addr %s1074, 8
          %s1076 = scalar_lea.vmem [#allocation9], %s1075
          %1077 = dma.done %s1073, 128
        $region68: #{tpu_custom_call.1} parent=63 // pred_fallthru
          _
      $region64: #{tpu_custom_call.1} parent=5 // pred_fallthru
        _
    $region6: #{tpu_custom_call.1} parent=1 // loop_footer
      %s22 = sadd.s32 1, %s18
    $region7: #{tpu_custom_call.1} parent=1 // loop_footer_branch
      %17 = sbr.rel target = $region3
    $region8: #{tpu_custom_call.1} parent=1 // loop_exit
      _
    %1078 = vsyncpa [#allocation4], 1
    %s1079 = scalar_lea.sflag [#allocation4], 1
    %1080 = vsyncpa %s1079, 1
    %1081 = vsyncpa [#allocation7], 1
    %1082 = vsyncpa [#allocation5], 1
    %s1083 = scalar_lea.sflag [#allocation5], 1
    %1084 = vsyncpa %s1083, 1

</llo_original>
